<compile_context>
chip_gen: v6e
topology: v6e:2x2x1
jax: 0.10.0
libtpu: 0.0.40
codegen_flags: <defaults>
</compile_context>

<pallas_src>
import math
from functools import partial

import jax
import jax.numpy as jnp
from jax.experimental import pallas as pl
from jax.experimental.pallas import tpu as pltpu

_LN_EPS = 1e-5
_NEG_INF = -1e9                     # Python float -> inlined literal (no const capture)
_RESIDENT_FFN_WEIGHT_BYTES = 24 * 1024 * 1024


# ----------------------------------------------------------------------------
# Tiling / per-generation settings
# ----------------------------------------------------------------------------
def _pick_tile(n, preferred):
    for t in preferred:
        if n % t == 0:
            return t
    return n


def _tpu_generation():
    try:
        kind = jax.devices()[0].device_kind.lower()
    except Exception:
        return None
    for g in ("v7", "v6", "v5"):
        if g in kind:
            return g
    return None


def _default_settings():
    gen = _tpu_generation()
    if gen == "v7":
        # 64 MiB physical VMEM per TensorCore -> keep the scoped cap tight.
        return {"vmem_limit": 56 * 1024 * 1024, "tq_pref": (256, 128, 64, 32, 16, 8)}
    if gen == "v5":
        # 128-wide MXU -> tq=128; 128 MiB physical VMEM -> generous scoped cap.
        return {"vmem_limit": 100 * 1024 * 1024, "tq_pref": (128, 64, 32, 16, 8)}
    if gen == "v6":
        # 256-wide MXU, 128 MiB VMEM.
        return {"vmem_limit": 100 * 1024 * 1024, "tq_pref": (256, 128, 64, 32, 16, 8)}
    # Unknown backend (e.g. interpret mode): conservative defaults.
    return {"vmem_limit": 64 * 1024 * 1024, "tq_pref": (256, 128, 64, 32, 16, 8)}


def _const_spec(shape, index_map):
    """BlockSpec whose block never changes across the grid (weights / biases /
    LayerNorm params): single-buffer it so it is DMA'd once and not
    double-buffered in VMEM."""
    try:
        return pl.BlockSpec(shape, index_map, pipeline_mode=pl.Buffered(1))
    except TypeError:                       # older jax without pipeline_mode kwarg
        return pl.BlockSpec(shape, index_map)


# ----------------------------------------------------------------------------
# In-kernel helpers
# ----------------------------------------------------------------------------
def _to_heads(mat, num_heads, d_k):
    """(rows, H*d_k) -> (H, rows, d_k) bf16 via a single relayout (no per-head
    lane-sliced stores)."""
    rows = mat.shape[0]
    return jnp.transpose(mat.reshape(rows, num_heads, d_k), (1, 0, 2)).astype(jnp.bfloat16)


def _online_attention(q_h, ks_ref, vs_ref, mask_ref, *, tk, n_kb, causal, q_start, scale):
    """Flash-style online-softmax attention over key blocks of size tk.

    q_h: (H, tq, d_k) bf16. ks_ref/vs_ref: (H, Tk, d_k) bf16 VMEM caches.
    Returns the (H, tq, d_k) f32 context.
    """
    num_heads, tq, d_k = q_h.shape
    m0 = jnp.full((num_heads, tq, 1), -1e30, dtype=jnp.float32)
    l0 = jnp.zeros((num_heads, tq, 1), dtype=jnp.float32)
    a0 = jnp.zeros((num_heads, tq, d_k), dtype=jnp.float32)

    def body(kb, carry):
        m, l, acc = carry
        k_start = pl.multiple_of(kb * tk, tk)
        k_blk = ks_ref[:, pl.ds(k_start, tk), :]                 # (H, tk, d_k) bf16
        v_blk = vs_ref[:, pl.ds(k_start, tk), :]
        s = jnp.einsum("hqd,hkd->hqk", q_h, k_blk,
                       preferred_element_type=jnp.float32) * scale
        if causal:
            # Causal mask generated in-kernel (no (B, T, T) mask DMA from HBM).
            row = q_start + jax.lax.broadcasted_iota(jnp.int32, (tq, tk), 0)
            col = k_start + jax.lax.broadcasted_iota(jnp.int32, (tq, tk), 1)
            s = jnp.where((col <= row)[None, :, :], s, _NEG_INF)
        if mask_ref is not None:
            # Mask dtype agnostic (f32 / int8 / bool); ==0 means "masked out".
            mblk = mask_ref[0, :, pl.ds(k_start, tk)]
            s = jnp.where((mblk == 0)[None, :, :], _NEG_INF, s)
        m_new = jnp.maximum(m, jnp.max(s, axis=-1, keepdims=True))
        alpha = jnp.exp(m - m_new)
        p = jnp.exp(s - m_new)
        l_new = alpha * l + jnp.sum(p, axis=-1, keepdims=True)
        acc_new = alpha * acc + jnp.einsum(
            "hqk,hkd->hqd", p.astype(jnp.bfloat16), v_blk,
            preferred_element_type=jnp.float32)
        return m_new, l_new, acc_new

    m, l, acc = jax.lax.fori_loop(0, n_kb, body, (m0, l0, a0))
    return acc * pl.reciprocal(l, approx=True)                   # (H, tq, d_k) f32


def _project_addnorm(ctx, x_res, wo_ref, bo_ref, g_ref, be_ref, o_ref, *, eps):
    """heads -> lane-dense (tq, D) slab (one relayout) -> out-projection ->
    fused residual + LayerNorm epilogue: o = x + LN(attn_out)."""
    num_heads, tq, d_k = ctx.shape
    cat = jnp.transpose(ctx, (1, 0, 2)).reshape(tq, num_heads * d_k)
    out = (jnp.dot(cat.astype(jnp.bfloat16), wo_ref[...],
                   preferred_element_type=jnp.float32) + bo_ref[...])
    mean = jnp.mean(out, axis=-1, keepdims=True)
    var = jnp.mean(jnp.square(out - mean), axis=-1, keepdims=True)
    normed = (out - mean) * jax.lax.rsqrt(var + eps) * g_ref[...] + be_ref[...]
    o_ref[0] = (x_res + normed).astype(o_ref.dtype)


# ----------------------------------------------------------------------------
# Kernels
# ----------------------------------------------------------------------------
def _self_attn_ln_kernel(x_ref, wqkv_ref, bqkv_ref, wo_ref, bo_ref, g_ref, be_ref,
                         o_ref, ks_ref, vs_ref, *, num_heads, d_k, tq, eps):
    """out = x + LN1(CausalSelfAttention(x)) for one (batch, query-tile) step."""
    qi = pl.program_id(1)
    d_model = num_heads * d_k
    q_start = pl.multiple_of(qi * tq, tq)

    # Project only this tile's rows through the fused (D, 3D) QKV weight.
    x_tile = x_ref[0]                                            # (tq, D) f32 (residual rows too)
    qkv = (jnp.dot(x_tile.astype(jnp.bfloat16), wqkv_ref[...],
                   preferred_element_type=jnp.float32) + bqkv_ref[...])
    q_h = _to_heads(qkv[:, :d_model], num_heads, d_k)
    k_h = _to_heads(qkv[:, d_model:2 * d_model], num_heads, d_k)
    v_h = _to_heads(qkv[:, 2 * d_model:], num_heads, d_k)

    # Incrementally extend the per-batch K/V cache with this tile's rows.
    # Valid because the q axis is sequential ("arbitrary") and causal attention
    # only reads keys at or below the current tile.
    ks_ref[:, pl.ds(q_start, tq), :] = k_h
    vs_ref[:, pl.ds(q_start, tq), :] = v_h

    # Online softmax over only the qi+1 key blocks at/below the diagonal.
    ctx = _online_attention(q_h, ks_ref, vs_ref, None, tk=tq, n_kb=qi + 1,
                            causal=True, q_start=q_start,
                            scale=1.0 / math.sqrt(d_k))
    _project_addnorm(ctx, x_tile, wo_ref, bo_ref, g_ref, be_ref, o_ref, eps=eps)


def _cross_attn_ln_kernel(*refs, num_heads, d_k, tk, n_kb, eps, has_mask):
    """out = x + LN2(CrossAttention(x, memory, memory, mask)) for one query tile."""
    if has_mask:
        (x_ref, mem_ref, mask_ref, wq_ref, bq_ref, wkv_ref, bkv_ref,
         wo_ref, bo_ref, g_ref, be_ref, o_ref, ks_ref, vs_ref) = refs
    else:
        (x_ref, mem_ref, wq_ref, bq_ref, wkv_ref, bkv_ref,
         wo_ref, bo_ref, g_ref, be_ref, o_ref, ks_ref, vs_ref) = refs
        mask_ref = None

    qi = pl.program_id(1)
    d_model = num_heads * d_k

    @pl.when(qi == 0)
    def _project_kv():
        # Fused K/V projection of memory, once per batch element.
        mb = mem_ref[0].astype(jnp.bfloat16)
        kv = (jnp.dot(mb, wkv_ref[...], preferred_element_type=jnp.float32)
              + bkv_ref[...])
        ks_ref[...] = _to_heads(kv[:, :d_model], num_heads, d_k)
        vs_ref[...] = _to_heads(kv[:, d_model:], num_heads, d_k)

    # Q projected per query tile (no full-T Q scratch).
    x_tile = x_ref[0]                                            # (tq, D) f32
    q = (jnp.dot(x_tile.astype(jnp.bfloat16), wq_ref[...],
                 preferred_element_type=jnp.float32) + bq_ref[...])
    q_h = _to_heads(q, num_heads, d_k)
    ctx = _online_attention(q_h, ks_ref, vs_ref, mask_ref, tk=tk, n_kb=n_kb,
                            causal=False, q_start=0, scale=1.0 / math.sqrt(d_k))
    _project_addnorm(ctx, x_tile, wo_ref, bo_ref, g_ref, be_ref, o_ref, eps=eps)


def _ffn_ln_resident_kernel(x_ref, w1_ref, b1_ref, w2_ref, b2_ref, g_ref, be_ref,
                            o_ref, *, eps):
    """out = x + LN3(ReLU(x@W1+b1)@W2+b2); W1/W2 fully VMEM-resident."""
    xb = x_ref[...].astype(jnp.bfloat16)                                  # (tr, D)
    h = jnp.maximum(jnp.dot(xb, w1_ref[...], preferred_element_type=jnp.float32)
                    + b1_ref[...], 0.0)                                   # (tr, F)
    y = (jnp.dot(h.astype(jnp.bfloat16), w2_ref[...],
                 preferred_element_type=jnp.float32) + b2_ref[...])       # (tr, D)
    mean = jnp.mean(y, axis=-1, keepdims=True)
    var = jnp.mean(jnp.square(y - mean), axis=-1, keepdims=True)
    normed = (y - mean) * jax.lax.rsqrt(var + eps) * g_ref[...] + be_ref[...]
    o_ref[...] = (x_ref[...] + normed).astype(o_ref.dtype)


def _ffn_ln_tiled_kernel(x_ref, w1_ref, b1_ref, w2_ref, b2_ref, g_ref, be_ref,
                         o_ref, acc_ref, *, eps):
    """Fallback when W1/W2 don't fit VMEM: hidden dim F tiled (reduction axis)."""
    f = pl.program_id(1)
    nf = pl.num_programs(1)

    @pl.when(f == 0)
    def _init():
        acc_ref[...] = jnp.zeros_like(acc_ref)

    xb = x_ref[...].astype(jnp.bfloat16)                                  # (tr, D)
    h = jnp.maximum(jnp.dot(xb, w1_ref[...], preferred_element_type=jnp.float32)
                    + b1_ref[...], 0.0)                                   # (tr, tF)
    acc_ref[...] += jnp.dot(h.astype(jnp.bfloat16), w2_ref[...],
                            preferred_element_type=jnp.float32)           # (tr, D)

    @pl.when(f == nf - 1)
    def _finalize():
        y = acc_ref[...] + b2_ref[...]
        mean = jnp.mean(y, axis=-1, keepdims=True)
        var = jnp.mean(jnp.square(y - mean), axis=-1, keepdims=True)
        normed = (y - mean) * jax.lax.rsqrt(var + eps) * g_ref[...] + be_ref[...]
        o_ref[...] = (x_ref[...] + normed).astype(o_ref.dtype)


# ----------------------------------------------------------------------------
# Pallas wrappers
# ----------------------------------------------------------------------------
def self_attn_block(x, wqkv, bqkv, wo, bo, gamma, beta, *, num_heads,
                    eps=_LN_EPS, tq=None, settings=None):
    B, T, D = x.shape
    d_k = D // num_heads
    st = settings or _default_settings()
    tq = tq or _pick_tile(T, st["tq_pref"])
    nq = T // tq
    kernel = partial(_self_attn_ln_kernel, num_heads=num_heads, d_k=d_k, tq=tq, eps=eps)
    return pl.pallas_call(
        kernel,
        out_shape=jax.ShapeDtypeStruct((B, T, D), x.dtype),
        grid=(B, nq),
        in_specs=[
            pl.BlockSpec((1, tq, D), lambda b, q: (b, q, 0)),      # x query tile
            _const_spec((D, 3 * D), lambda b, q: (0, 0)),          # fused Wqkv (bf16)
            _const_spec((1, 3 * D), lambda b, q: (0, 0)),
            _const_spec((D, D), lambda b, q: (0, 0)),              # Wo (bf16)
            _const_spec((1, D), lambda b, q: (0, 0)),
            _const_spec((1, D), lambda b, q: (0, 0)),              # LN gamma
            _const_spec((1, D), lambda b, q: (0, 0)),              # LN beta
        ],
        out_specs=pl.BlockSpec((1, tq, D), lambda b, q: (b, q, 0)),
        scratch_shapes=[
            pltpu.VMEM((num_heads, T, d_k), jnp.bfloat16),         # running K cache
            pltpu.VMEM((num_heads, T, d_k), jnp.bfloat16),         # running V cache
        ],
        compiler_params=pltpu.CompilerParams(
            dimension_semantics=("parallel", "arbitrary"),
            vmem_limit_bytes=st["vmem_limit"]),
    )(x, wqkv, bqkv, wo, bo, gamma, beta)


def cross_attn_block(x, memory, mask, wq, bq, wkv, bkv, wo, bo, gamma, beta,
                     *, num_heads, eps=_LN_EPS, tq=None, tk=None, settings=None):
    B, T, D = x.shape
    Tk = memory.shape[1]
    d_k = D // num_heads
    st = settings or _default_settings()
    tq = tq or _pick_tile(T, st["tq_pref"])
    tk = tk or _pick_tile(Tk, st["tq_pref"])
    nq = T // tq
    n_kb = Tk // tk
    has_mask = mask is not None
    kernel = partial(_cross_attn_ln_kernel, num_heads=num_heads, d_k=d_k,
                     tk=tk, n_kb=n_kb, eps=eps, has_mask=has_mask)

    in_specs = [
        pl.BlockSpec((1, tq, D), lambda b, q: (b, q, 0)),          # x query tile
        pl.BlockSpec((1, Tk, D), lambda b, q: (b, 0, 0)),          # memory (per batch)
    ]
    args = [x, memory]
    if has_mask:
        in_specs.append(pl.BlockSpec((1, tq, Tk), lambda b, q: (b, q, 0)))
        args.append(mask)
    in_specs += [
        _const_spec((D, D), lambda b, q: (0, 0)),                  # Wq
        _const_spec((1, D), lambda b, q: (0, 0)),
        _const_spec((D, 2 * D), lambda b, q: (0, 0)),              # fused Wkv
        _const_spec((1, 2 * D), lambda b, q: (0, 0)),
        _const_spec((D, D), lambda b, q: (0, 0)),                  # Wo
        _const_spec((1, D), lambda b, q: (0, 0)),
        _const_spec((1, D), lambda b, q: (0, 0)),                  # LN gamma
        _const_spec((1, D), lambda b, q: (0, 0)),                  # LN beta
    ]
    args += [wq, bq, wkv, bkv, wo, bo, gamma, beta]

    return pl.pallas_call(
        kernel,
        out_shape=jax.ShapeDtypeStruct((B, T, D), x.dtype),
        grid=(B, nq),
        in_specs=in_specs,
        out_specs=pl.BlockSpec((1, tq, D), lambda b, q: (b, q, 0)),
        scratch_shapes=[
            pltpu.VMEM((num_heads, Tk, d_k), jnp.bfloat16),        # K heads (memory)
            pltpu.VMEM((num_heads, Tk, d_k), jnp.bfloat16),        # V heads (memory)
        ],
        compiler_params=pltpu.CompilerParams(
            dimension_semantics=("parallel", "arbitrary"),
            vmem_limit_bytes=st["vmem_limit"]),
    )(*args)


def ffn_block(x, w1, b1, w2, b2, gamma, beta, *, eps=_LN_EPS, tr=None, tf=None,
              settings=None):
    B, T, D = x.shape
    F = w1.shape[1]
    N = B * T
    xf = x.reshape(N, D)
    st = settings or _default_settings()

    weight_bytes = (w1.size + w2.size) * w1.dtype.itemsize
    if weight_bytes <= _RESIDENT_FFN_WEIGHT_BYTES:
        # W1/W2 VMEM-resident: DMA'd once (constant index maps, single buffer),
        # single grid axis, no accumulator scratch.
        tr = tr or _pick_tile(N, (512, 256, 128, 64, 32, 16, 8))
        out = pl.pallas_call(
            partial(_ffn_ln_resident_kernel, eps=eps),
            out_shape=jax.ShapeDtypeStruct((N, D), x.dtype),
            grid=(N // tr,),
            in_specs=[
                pl.BlockSpec((tr, D), lambda r: (r, 0)),           # x rows (residual too)
                _const_spec((D, F), lambda r: (0, 0)),             # W1
                _const_spec((1, F), lambda r: (0, 0)),
                _const_spec((F, D), lambda r: (0, 0)),             # W2
                _const_spec((1, D), lambda r: (0, 0)),
                _const_spec((1, D), lambda r: (0, 0)),             # LN gamma
                _const_spec((1, D), lambda r: (0, 0)),             # LN beta
            ],
            out_specs=pl.BlockSpec((tr, D), lambda r: (r, 0)),
            compiler_params=pltpu.CompilerParams(
                dimension_semantics=("parallel",),
                vmem_limit_bytes=st["vmem_limit"]),
        )(xf, w1, b1, w2, b2, gamma, beta)
    else:
        # Large FFN: tile the hidden dim (reduction) and use a big row tile so
        # the weight re-streaming is amortized over more compute per tile.
        tr = tr or _pick_tile(N, (1024, 512, 256, 128, 64, 32, 16, 8))
        tf = tf or _pick_tile(F, (2048, 1024, 512, 256, 128))
        out = pl.pallas_call(
            partial(_ffn_ln_tiled_kernel, eps=eps),
            out_shape=jax.ShapeDtypeStruct((N, D), x.dtype),
            grid=(N // tr, F // tf),
            in_specs=[
                pl.BlockSpec((tr, D), lambda r, f: (r, 0)),
                pl.BlockSpec((D, tf), lambda r, f: (0, f)),        # W1 column tile
                pl.BlockSpec((1, tf), lambda r, f: (0, f)),
                pl.BlockSpec((tf, D), lambda r, f: (f, 0)),        # W2 row tile
                _const_spec((1, D), lambda r, f: (0, 0)),
                _const_spec((1, D), lambda r, f: (0, 0)),          # LN gamma
                _const_spec((1, D), lambda r, f: (0, 0)),          # LN beta
            ],
            out_specs=pl.BlockSpec((tr, D), lambda r, f: (r, 0)),
            scratch_shapes=[pltpu.VMEM((tr, D), jnp.float32)],     # f32 accumulator
            compiler_params=pltpu.CompilerParams(
                dimension_semantics=("parallel", "arbitrary"),
                vmem_limit_bytes=st["vmem_limit"]),
        )(xf, w1, b1, w2, b2, gamma, beta)
    return out.reshape(B, T, D)


# ----------------------------------------------------------------------------
# DecoderBlock forward
# ----------------------------------------------------------------------------
def decoder_block_forward(x, memory, src_mask, tgt_mask, p, *, num_heads):
    # Self-attention sub-layer: x = x + LN1(SelfAttn(x, x, x, tgt_mask)).
    # tgt_mask is assumed to be the standard causal mask, generated in-kernel
    # via iota (no (B, T, T) mask DMA).
    # TODO(synk): an arbitrary (non-causal / padded) tgt_mask would need an
    # explicit mask input like cross_attn_block's has_mask path.
    del tgt_mask
    x = self_attn_block(x, p["wqkv_self"], p["bqkv_self"], p["wo_self"], p["bo_self"],
                        p["ln1_g"], p["ln1_b"], num_heads=num_heads)
    # Cross-attention sub-layer: x = x + LN2(SrcAttn(x, mem, mem, src_mask)).
    # src_mask=None means "no masking" (equivalent to an all-ones mask); a real
    # mask can be passed in any dtype (int8/bool/f32), ==0 entries are masked.
    x = cross_attn_block(x, memory, src_mask, p["wq_x"], p["bq_x"],
                         p["wkv_x"], p["bkv_x"], p["wo_x"], p["bo_x"],
                         p["ln2_g"], p["ln2_b"], num_heads=num_heads)
    # Feed-forward sub-layer: x = x + LN3(FFN(x)).
    x = ffn_block(x, p["w1"], p["b1"], p["w2"], p["b2"], p["ln3_g"], p["ln3_b"])
    return x


# ----------------------------------------------------------------------------
# Parameters (base f32 for the reference; packed/fused bf16 for the kernels)
# ----------------------------------------------------------------------------
def init_base_params(key, d_model, dim_ff):
    ks = jax.random.split(key, 20)

    def lin(kw, kb, din, dout):
        w = jax.random.normal(kw, (din, dout), jnp.float32) * 0.05
        b = jax.random.normal(kb, (1, dout), jnp.float32) * 0.05
        return w, b

    def mha_params(kidx):
        wq, bq = lin(ks[kidx + 0], ks[kidx + 1], d_model, d_model)
        wk, bk = lin(ks[kidx + 2], ks[kidx + 3], d_model, d_model)
        wv, bv = lin(ks[kidx + 4], ks[kidx + 5], d_model, d_model)
        wo, bo = lin(ks[kidx + 6], ks[kidx + 7], d_model, d_model)
        return (wq, bq, wk, bk, wv, bv, wo, bo)

    w1, b1 = lin(ks[16], ks[17], d_model, dim_ff)
    w2, b2 = lin(ks[18], ks[19], dim_ff, d_model)
    ones = jnp.ones((1, d_model), jnp.float32)
    zeros = jnp.zeros((1, d_model), jnp.float32)
    return {
        "self_attn": mha_params(0), "src_attn": mha_params(8),
        "w1": w1, "b1": b1, "w2": w2, "b2": b2,
        "ln1_g": ones, "ln1_b": zeros,
        "ln2_g": ones, "ln2_b": zeros,
        "ln3_g": ones, "ln3_b": zeros,
    }


def pack_params(base):
    """Fuse Q/K/V (self) and K/V (cross) weights; cast weights to bf16."""
    bf = lambda w: w.astype(jnp.bfloat16)
    wq, bq, wk, bk, wv, bv, wo, bo = base["self_attn"]
    wqx, bqx, wkx, bkx, wvx, bvx, wox, box = base["src_attn"]
    return {
        "wqkv_self": bf(jnp.concatenate([wq, wk, wv], axis=1)),
        "bqkv_self": jnp.concatenate([bq, bk, bv], axis=1),
        "wo_self": bf(wo), "bo_self": bo,
        "wq_x": bf(wqx), "bq_x": bqx,
        "wkv_x": bf(jnp.concatenate([wkx, wvx], axis=1)),
        "bkv_x": jnp.concatenate([bkx, bvx], axis=1),
        "wo_x": bf(wox), "bo_x": box,
        "w1": bf(base["w1"]), "b1": base["b1"],
        "w2": bf(base["w2"]), "b2": base["b2"],
        "ln1_g": base["ln1_g"], "ln1_b": base["ln1_b"],
        "ln2_g": base["ln2_g"], "ln2_b": base["ln2_b"],
        "ln3_g": base["ln3_g"], "ln3_b": base["ln3_b"],
    }


# ----------------------------------------------------------------------------
# Pure-JAX reference (mirrors the PyTorch module in eval mode; casts matmul
# inputs to bf16 exactly like the kernels so the comparison is tight)
# ----------------------------------------------------------------------------
def _ref_linear(x, w, b):
    return jnp.dot(x.astype(jnp.bfloat16), w.astype(jnp.bfloat16),
                   preferred_element_type=jnp.float32) + b


def _ref_mha(xq, xkv, mask, wq, bq, wk, bk, wv, bv, wo, bo, num_heads):
    B, Tq, D = xq.shape
    Tk = xkv.shape[1]
    d_k = D // num_heads
    Q = _ref_linear(xq, wq, bq).reshape(B, Tq, num_heads, d_k).transpose(0, 2, 1, 3)
    K = _ref_linear(xkv, wk, bk).reshape(B, Tk, num_heads, d_k).transpose(0, 2, 1, 3)
    V = _ref_linear(xkv, wv, bv).reshape(B, Tk, num_heads, d_k).transpose(0, 2, 1, 3)
    s = jnp.einsum("bhqd,bhkd->bhqk", Q.astype(jnp.bfloat16), K.astype(jnp.bfloat16),
                   preferred_element_type=jnp.float32) / math.sqrt(d_k)
    if mask is not None:
        s = jnp.where(mask[:, None, :, :] == 0, -1e9, s)
    p = jax.nn.softmax(s, axis=-1)
    o = jnp.einsum("bhqk,bhkd->bhqd", p.astype(jnp.bfloat16), V.astype(jnp.bfloat16),
                   preferred_element_type=jnp.float32)
    o = o.transpose(0, 2, 1, 3).reshape(B, Tq, D)
    return _ref_linear(o, wo, bo)


def _ref_layernorm(y, g, b, eps=_LN_EPS):
    mean = y.mean(-1, keepdims=True)
    var = ((y - mean) ** 2).mean(-1, keepdims=True)
    return (y - mean) / jnp.sqrt(var + eps) * g + b


def _ref_decoder_block(x, memory, src_mask, tgt_mask, p, num_heads):
    a = _ref_mha(x, x, tgt_mask, *p["self_attn"], num_heads)
    x = x + _ref_layernorm(a, p["ln1_g"], p["ln1_b"])
    a = _ref_mha(x, memory, src_mask, *p["src_attn"], num_heads)
    x = x + _ref_layernorm(a, p["ln2_g"], p["ln2_b"])
    h = jnp.maximum(_ref_linear(x, p["w1"], p["b1"]), 0.0)
    f = _ref_linear(h, p["w2"], p["b2"])
    x = x + _ref_layernorm(f, p["ln3_g"], p["ln3_b"])
    return x


# ----------------------------------------------------------------------------
if __name__ == "__main__":
    B, T, S, D, H, FF = 2, 8, 8, 32, 4, 64

    key = jax.random.PRNGKey(0)
    k_x, k_mem, k_p = jax.random.split(key, 3)

    x = jax.random.normal(k_x, (B, T, D), jnp.float32)
    memory = jax.random.normal(k_mem, (B, S, D), jnp.float32)
    # Causal target mask (used by the reference; the kernel builds it in-kernel)
    # and an all-ones source mask (== no masking; the kernel skips it entirely).
    tgt_mask = jnp.broadcast_to(jnp.tril(jnp.ones((T, T), jnp.float32)), (B, T, T))
    src_mask = jnp.ones((B, T, S), jnp.float32)

    base = init_base_params(k_p, D, FF)
    params = pack_params(base)

    out = decoder_block_forward(x, memory, None, tgt_mask, params, num_heads=H)
    out = jax.block_until_ready(out)

    ref = _ref_decoder_block(x, memory, src_mask, tgt_mask, base, H)
    assert out.shape == (B, T, D)
    # Tolerance covers the approx-reciprocal softmax normalization, bf16 rounding
    # of attention probabilities at slightly different points, and op-ordering
    # differences; matmul inputs are bf16 in both paths.
    assert jnp.allclose(out, ref, atol=3e-2, rtol=3e-2), (
        f"max err {jnp.max(jnp.abs(out - ref))}"
    )
    print("KERNEL_OK")
</pallas_src>

<mosaic_0001>
module attributes {stable_mosaic.version = 11 : i64} {
  func.func @_self_attn_ln_kernel(%arg0: i32, %arg1: i32, %arg2: memref<1x8x32xf32, #tpu.memory_space<vmem>>, %arg3: memref<32x96xbf16, #tpu.memory_space<vmem>>, %arg4: memref<1x96xf32, #tpu.memory_space<vmem>>, %arg5: memref<32x32xbf16, #tpu.memory_space<vmem>>, %arg6: memref<1x32xf32, #tpu.memory_space<vmem>>, %arg7: memref<1x32xf32, #tpu.memory_space<vmem>>, %arg8: memref<1x32xf32, #tpu.memory_space<vmem>>, %arg9: memref<1x8x32xf32, #tpu.memory_space<vmem>>, %arg10: memref<4x8x8xbf16, #tpu.memory_space<vmem>>, %arg11: memref<4x8x8xbf16, #tpu.memory_space<vmem>>) attributes {dimension_semantics = [#tpu.dimension_semantics<parallel>, #tpu.dimension_semantics<arbitrary>], iteration_bounds = array<i64: 2, 1>, scalar_prefetch = 0 : i64, scratch_operands = 2 : i64, tpu.core_type = #tpu.core_type<tc>, window_params = [{transform_indices = @transform_0, window_bounds = array<i64: 1, 8, 32>}, {pipeline_mode = #tpu.pipeline_mode<synchronous>, transform_indices = @transform_1, window_bounds = array<i64: 32, 96>}, {pipeline_mode = #tpu.pipeline_mode<synchronous>, transform_indices = @transform_2, window_bounds = array<i64: 1, 96>}, {pipeline_mode = #tpu.pipeline_mode<synchronous>, transform_indices = @transform_3, window_bounds = array<i64: 32, 32>}, {pipeline_mode = #tpu.pipeline_mode<synchronous>, transform_indices = @transform_4, window_bounds = array<i64: 1, 32>}, {pipeline_mode = #tpu.pipeline_mode<synchronous>, transform_indices = @transform_5, window_bounds = array<i64: 1, 32>}, {pipeline_mode = #tpu.pipeline_mode<synchronous>, transform_indices = @transform_6, window_bounds = array<i64: 1, 32>}, {transform_indices = @transform_7, window_bounds = array<i64: 1, 8, 32>}]} {
    %c8_i32 = arith.constant 8 : i32
    %0 = arith.muli %arg1, %c8_i32 : i32
    %1 = tpu.assume_multiple %0, 8 : i32
    %c0 = arith.constant 0 : index
    %c0_0 = arith.constant 0 : index
    %c0_1 = arith.constant 0 : index
    %2 = vector.load %arg2[%c0, %c0_0, %c0_1] : memref<1x8x32xf32, #tpu.memory_space<vmem>>, vector<1x8x32xf32>
    %3 = vector.shape_cast %2 : vector<1x8x32xf32> to vector<8x32xf32>
    %4 = arith.truncf %3 : vector<8x32xf32> to vector<8x32xbf16>
    %c0_2 = arith.constant 0 : index
    %c0_3 = arith.constant 0 : index
    %5 = vector.load %arg3[%c0_2, %c0_3] : memref<32x96xbf16, #tpu.memory_space<vmem>>, vector<32x96xbf16>
    %cst = arith.constant dense<0.000000e+00> : vector<8x96xf32>
    %6 = tpu.matmul %4, %5, %cst {dimension_numbers = #tpu.dot_dimension_numbers<[1], [0], [0], [1], [0, 0, 1, 1], [], []>} : vector<8x32xbf16>, vector<32x96xbf16>, vector<8x96xf32> -> vector<8x96xf32>
    %c0_4 = arith.constant 0 : index
    %c0_5 = arith.constant 0 : index
    %7 = vector.load %arg4[%c0_4, %c0_5] : memref<1x96xf32, #tpu.memory_space<vmem>>, vector<1x96xf32>
    %8 = vector.broadcast %7 : vector<1x96xf32> to vector<8x96xf32>
    %9 = arith.addf %6, %8 : vector<8x96xf32>
    %10 = vector.extract_strided_slice %9 {offsets = [0, 0], sizes = [8, 32], strides = [1, 1]} : vector<8x96xf32> to vector<8x32xf32>
    %11 = vector.shape_cast %10 : vector<8x32xf32> to vector<8x4x8xf32>
    %12 = tpu.transpose %11, [1, 0, 2] : vector<8x4x8xf32> -> vector<4x8x8xf32>
    %13 = arith.truncf %12 : vector<4x8x8xf32> to vector<4x8x8xbf16>
    %14 = vector.extract_strided_slice %9 {offsets = [0, 32], sizes = [8, 32], strides = [1, 1]} : vector<8x96xf32> to vector<8x32xf32>
    %15 = vector.shape_cast %14 : vector<8x32xf32> to vector<8x4x8xf32>
    %16 = tpu.transpose %15, [1, 0, 2] : vector<8x4x8xf32> -> vector<4x8x8xf32>
    %17 = arith.truncf %16 : vector<4x8x8xf32> to vector<4x8x8xbf16>
    %18 = vector.extract_strided_slice %9 {offsets = [0, 64], sizes = [8, 32], strides = [1, 1]} : vector<8x96xf32> to vector<8x32xf32>
    %19 = vector.shape_cast %18 : vector<8x32xf32> to vector<8x4x8xf32>
    %20 = tpu.transpose %19, [1, 0, 2] : vector<8x4x8xf32> -> vector<4x8x8xf32>
    %21 = arith.truncf %20 : vector<4x8x8xf32> to vector<4x8x8xbf16>
    %c0_6 = arith.constant 0 : index
    %22 = arith.index_cast %1 : i32 to index
    %c0_7 = arith.constant 0 : index
    %23 = vector.load %arg10[%c0_6, %22, %c0_7] : memref<4x8x8xbf16, #tpu.memory_space<vmem>>, vector<4x8x8xbf16>
    tpu.vector_store %arg10[%c0_6, %22, %c0_7], %17 {strides = array<i32>} : memref<4x8x8xbf16, #tpu.memory_space<vmem>>, vector<4x8x8xbf16>,
    %c0_8 = arith.constant 0 : index
    %24 = arith.index_cast %1 : i32 to index
    %c0_9 = arith.constant 0 : index
    %25 = vector.load %arg11[%c0_8, %24, %c0_9] : memref<4x8x8xbf16, #tpu.memory_space<vmem>>, vector<4x8x8xbf16>
    tpu.vector_store %arg11[%c0_8, %24, %c0_9], %21 {strides = array<i32>} : memref<4x8x8xbf16, #tpu.memory_space<vmem>>, vector<4x8x8xbf16>,
    %c1_i32 = arith.constant 1 : i32
    %26 = arith.addi %arg1, %c1_i32 : i32
    %cst_10 = arith.constant -1.000000e+30 : f32
    %27 = vector.broadcast %cst_10 : f32 to vector<4x8x1xf32>
    %cst_11 = arith.constant 0.000000e+00 : f32
    %28 = vector.broadcast %cst_11 : f32 to vector<4x8x1xf32>
    %cst_12 = arith.constant 0.000000e+00 : f32
    %29 = vector.broadcast %cst_12 : f32 to vector<4x8x8xf32>
    %c0_i32 = arith.constant 0 : i32
    %30 = arith.subi %26, %c0_i32 : i32
    %31 = arith.addi %c0_i32, %30 : i32
    %c1_i32_13 = arith.constant 1 : i32
    %32:3 = scf.for %arg12 = %c0_i32 to %31 step %c1_i32_13 iter_args(%arg13 = %27, %arg14 = %28, %arg15 = %29) -> (vector<4x8x1xf32>, vector<4x8x1xf32>, vector<4x8x8xf32>)  : i32 {
      %c8_i32_31 = arith.constant 8 : i32
      %72 = arith.muli %arg12, %c8_i32_31 : i32
      %73 = tpu.assume_multiple %72, 8 : i32
      %c0_32 = arith.constant 0 : index
      %74 = arith.index_cast %73 : i32 to index
      %c0_33 = arith.constant 0 : index
      %75 = vector.load %arg10[%c0_32, %74, %c0_33] : memref<4x8x8xbf16, #tpu.memory_space<vmem>>, vector<4x8x8xbf16>
      %c0_34 = arith.constant 0 : index
      %76 = arith.index_cast %73 : i32 to index
      %c0_35 = arith.constant 0 : index
      %77 = vector.load %arg11[%c0_34, %76, %c0_35] : memref<4x8x8xbf16, #tpu.memory_space<vmem>>, vector<4x8x8xbf16>
      "tpu.trace_start"() <{level = 10 : i32, message = "hqd,hkd->hqk"}> : () -> ()
      %cst_36 = arith.constant dense<0.000000e+00> : vector<4x8x8xf32>
      %78 = tpu.matmul %13, %75, %cst_36 {dimension_numbers = #tpu.dot_dimension_numbers<[2], [2], [1], [1], [0, 0, 0, 1, 1, 1], [0], [0]>} : vector<4x8x8xbf16>, vector<4x8x8xbf16>, vector<4x8x8xf32> -> vector<4x8x8xf32>
      "tpu.trace_stop"() : () -> ()
      %cst_37 = arith.constant 0.353553385 : f32
      %79 = vector.broadcast %cst_37 : f32 to vector<4x8x8xf32>
      %80 = arith.mulf %78, %79 : vector<4x8x8xf32>
      %81 = tpu.iota {dimensions = array<i32: 0>} : vector<8x8xi32>
      %82 = vector.broadcast %1 : i32 to vector<8x8xi32>
      %83 = arith.addi %82, %81 : vector<8x8xi32>
      %84 = tpu.iota {dimensions = array<i32: 1>} : vector<8x8xi32>
      %85 = vector.broadcast %73 : i32 to vector<8x8xi32>
      %86 = arith.addi %85, %84 : vector<8x8xi32>
      %87 = arith.cmpi sle, %86, %83 : vector<8x8xi32>
      %88 = vector.shape_cast %87 : vector<8x8xi1> to vector<1x8x8xi1>
      %cst_38 = arith.constant -1.000000e+09 : f32
      %89 = vector.shape_cast %88 : vector<1x8x8xi1> to vector<1x8x8xi1>
      %90 = vector.broadcast %89 : vector<1x8x8xi1> to vector<4x8x8xi1>
      %91 = vector.broadcast %cst_38 : f32 to vector<4x8x8xf32>
      %92 = arith.select %90, %80, %91 : vector<4x8x8xi1>, vector<4x8x8xf32>
      %cst_39 = arith.constant dense<0xFF800000> : vector<4x8xf32>
      %93 = vector.multi_reduction <maximumf>, %92, %cst_39 [2] : vector<4x8x8xf32> to vector<4x8xf32>
      %94 = vector.shape_cast %93 : vector<4x8xf32> to vector<4x8x1xf32>
      %95 = arith.maximumf %arg13, %94 : vector<4x8x1xf32>
      %96 = arith.subf %arg13, %95 : vector<4x8x1xf32>
      %97 = math.exp %96 : vector<4x8x1xf32>
      %98 = vector.broadcast %95 : vector<4x8x1xf32> to vector<4x8x8xf32>
      %99 = arith.subf %92, %98 : vector<4x8x8xf32>
      %100 = math.exp %99 : vector<4x8x8xf32>
      %101 = arith.mulf %97, %arg14 : vector<4x8x1xf32>
      %cst_40 = arith.constant dense<0.000000e+00> : vector<4x8xf32>
      %102 = vector.multi_reduction <add>, %100, %cst_40 [2] : vector<4x8x8xf32> to vector<4x8xf32>
      %103 = vector.shape_cast %102 : vector<4x8xf32> to vector<4x8x1xf32>
      %104 = arith.addf %101, %103 : vector<4x8x1xf32>
      %105 = vector.broadcast %97 : vector<4x8x1xf32> to vector<4x8x8xf32>
      %106 = arith.mulf %105, %arg15 : vector<4x8x8xf32>
      %107 = arith.truncf %100 : vector<4x8x8xf32> to vector<4x8x8xbf16>
      "tpu.trace_start"() <{level = 10 : i32, message = "hqk,hkd->hqd"}> : () -> ()
      %cst_41 = arith.constant dense<0.000000e+00> : vector<4x8x8xf32>
      %108 = tpu.matmul %107, %77, %cst_41 {dimension_numbers = #tpu.dot_dimension_numbers<[2], [1], [1], [2], [0, 0, 0, 1, 1, 2], [0], [0]>} : vector<4x8x8xbf16>, vector<4x8x8xbf16>, vector<4x8x8xf32> -> vector<4x8x8xf32>
      "tpu.trace_stop"() : () -> ()
      %109 = arith.addf %106, %108 : vector<4x8x8xf32>
      scf.yield %95, %104, %109 : vector<4x8x1xf32>, vector<4x8x1xf32>, vector<4x8x8xf32>
    }
    %33 = tpu.reciprocal %32#1 {approx = true} : vector<4x8x1xf32> -> vector<4x8x1xf32>
    %34 = vector.broadcast %33 : vector<4x8x1xf32> to vector<4x8x8xf32>
    %35 = arith.mulf %32#2, %34 : vector<4x8x8xf32>
    %36 = tpu.transpose %35, [1, 0, 2] : vector<4x8x8xf32> -> vector<8x4x8xf32>
    %37 = vector.shape_cast %36 : vector<8x4x8xf32> to vector<8x32xf32>
    %38 = arith.truncf %37 : vector<8x32xf32> to vector<8x32xbf16>
    %c0_14 = arith.constant 0 : index
    %c0_15 = arith.constant 0 : index
    %39 = vector.load %arg5[%c0_14, %c0_15] : memref<32x32xbf16, #tpu.memory_space<vmem>>, vector<32x32xbf16>
    %cst_16 = arith.constant dense<0.000000e+00> : vector<8x32xf32>
    %40 = tpu.matmul %38, %39, %cst_16 {dimension_numbers = #tpu.dot_dimension_numbers<[1], [0], [0], [1], [0, 0, 1, 1], [], []>} : vector<8x32xbf16>, vector<32x32xbf16>, vector<8x32xf32> -> vector<8x32xf32>
    %c0_17 = arith.constant 0 : index
    %c0_18 = arith.constant 0 : index
    %41 = vector.load %arg6[%c0_17, %c0_18] : memref<1x32xf32, #tpu.memory_space<vmem>>, vector<1x32xf32>
    %42 = vector.broadcast %41 : vector<1x32xf32> to vector<8x32xf32>
    %43 = arith.addf %40, %42 : vector<8x32xf32>
    %cst_19 = arith.constant dense<0.000000e+00> : vector<8xf32>
    %44 = vector.multi_reduction <add>, %43, %cst_19 [1] : vector<8x32xf32> to vector<8xf32>
    %45 = vector.shape_cast %44 : vector<8xf32> to vector<8x1xf32>
    %cst_20 = arith.constant 3.200000e+01 : f32
    %46 = vector.broadcast %cst_20 : f32 to vector<8x1xf32>
    %47 = arith.divf %45, %46 : vector<8x1xf32>
    %48 = vector.broadcast %47 : vector<8x1xf32> to vector<8x32xf32>
    %49 = arith.subf %43, %48 : vector<8x32xf32>
    %50 = arith.mulf %49, %49 : vector<8x32xf32>
    %cst_21 = arith.constant dense<0.000000e+00> : vector<8xf32>
    %51 = vector.multi_reduction <add>, %50, %cst_21 [1] : vector<8x32xf32> to vector<8xf32>
    %52 = vector.shape_cast %51 : vector<8xf32> to vector<8x1xf32>
    %cst_22 = arith.constant 3.200000e+01 : f32
    %53 = vector.broadcast %cst_22 : f32 to vector<8x1xf32>
    %54 = arith.divf %52, %53 : vector<8x1xf32>
    %55 = vector.broadcast %47 : vector<8x1xf32> to vector<8x32xf32>
    %56 = arith.subf %43, %55 : vector<8x32xf32>
    %cst_23 = arith.constant 9.99999974E-6 : f32
    %57 = vector.broadcast %cst_23 : f32 to vector<8x1xf32>
    %58 = arith.addf %54, %57 : vector<8x1xf32>
    %59 = math.rsqrt %58 : vector<8x1xf32>
    %60 = vector.broadcast %59 : vector<8x1xf32> to vector<8x32xf32>
    %61 = arith.mulf %56, %60 : vector<8x32xf32>
    %c0_24 = arith.constant 0 : index
    %c0_25 = arith.constant 0 : index
    %62 = vector.load %arg7[%c0_24, %c0_25] : memref<1x32xf32, #tpu.memory_space<vmem>>, vector<1x32xf32>
    %63 = vector.broadcast %62 : vector<1x32xf32> to vector<8x32xf32>
    %64 = arith.mulf %61, %63 : vector<8x32xf32>
    %c0_26 = arith.constant 0 : index
    %c0_27 = arith.constant 0 : index
    %65 = vector.load %arg8[%c0_26, %c0_27] : memref<1x32xf32, #tpu.memory_space<vmem>>, vector<1x32xf32>
    %66 = vector.broadcast %65 : vector<1x32xf32> to vector<8x32xf32>
    %67 = arith.addf %64, %66 : vector<8x32xf32>
    %68 = arith.addf %3, %67 : vector<8x32xf32>
    %c0_28 = arith.constant 0 : index
    %c0_29 = arith.constant 0 : index
    %c0_30 = arith.constant 0 : index
    %69 = vector.load %arg9[%c0_28, %c0_29, %c0_30] : memref<1x8x32xf32, #tpu.memory_space<vmem>>, vector<1x8x32xf32>
    %70 = vector.shape_cast %69 : vector<1x8x32xf32> to vector<8x32xf32>
    %71 = vector.shape_cast %68 : vector<8x32xf32> to vector<1x8x32xf32>
    tpu.vector_store %arg9[%c0_28, %c0_29, %c0_30], %71 {strides = array<i32>} : memref<1x8x32xf32, #tpu.memory_space<vmem>>, vector<1x8x32xf32>,
    return
  }
  func.func @transform_0(%arg0: i32, %arg1: i32) -> (i32, i32, i32) {
    %c0_i32 = arith.constant 0 : i32
    %c0_i32_0 = arith.constant 0 : i32
    return %arg0, %arg1, %c0_i32 : i32, i32, i32
  }
  func.func @transform_1(%arg0: i32, %arg1: i32) -> (i32, i32) {
    %c0_i32 = arith.constant 0 : i32
    %c0_i32_0 = arith.constant 0 : i32
    %c0_i32_1 = arith.constant 0 : i32
    return %c0_i32, %c0_i32_0 : i32, i32
  }
  func.func @transform_2(%arg0: i32, %arg1: i32) -> (i32, i32) {
    %c0_i32 = arith.constant 0 : i32
    %c0_i32_0 = arith.constant 0 : i32
    %c0_i32_1 = arith.constant 0 : i32
    return %c0_i32, %c0_i32_0 : i32, i32
  }
  func.func @transform_3(%arg0: i32, %arg1: i32) -> (i32, i32) {
    %c0_i32 = arith.constant 0 : i32
    %c0_i32_0 = arith.constant 0 : i32
    %c0_i32_1 = arith.constant 0 : i32
    return %c0_i32, %c0_i32_0 : i32, i32
  }
  func.func @transform_4(%arg0: i32, %arg1: i32) -> (i32, i32) {
    %c0_i32 = arith.constant 0 : i32
    %c0_i32_0 = arith.constant 0 : i32
    %c0_i32_1 = arith.constant 0 : i32
    return %c0_i32, %c0_i32_0 : i32, i32
  }
  func.func @transform_5(%arg0: i32, %arg1: i32) -> (i32, i32) {
    %c0_i32 = arith.constant 0 : i32
    %c0_i32_0 = arith.constant 0 : i32
    %c0_i32_1 = arith.constant 0 : i32
    return %c0_i32, %c0_i32_0 : i32, i32
  }
  func.func @transform_6(%arg0: i32, %arg1: i32) -> (i32, i32) {
    %c0_i32 = arith.constant 0 : i32
    %c0_i32_0 = arith.constant 0 : i32
    %c0_i32_1 = arith.constant 0 : i32
    return %c0_i32, %c0_i32_0 : i32, i32
  }
  func.func @transform_7(%arg0: i32, %arg1: i32) -> (i32, i32, i32) {
    %c0_i32 = arith.constant 0 : i32
    %c0_i32_0 = arith.constant 0 : i32
    return %arg0, %arg1, %c0_i32 : i32, i32, i32
  }
}

</mosaic_0001>

<llo_original>
// kernel: tpu_custom_call.1
$region0: #{tpu_custom_call.1}
  #allocation0 [shape = 'u32[]', space=smem, size = 0x4, offset = 0x4, fixed_abs, tag = 'smem constant byte address 0x4 - core index']
  #allocation1 [shape = 'u32[144,128]{1,0:T(1,128)}', space=vmem, size = 0x12000, scoped, tag = 'internal scratch']
  #allocation2 [shape = 'bf16[4,8,8]{2,1,0:T(8,128)(2,1)}', space=vmem, size = 0x2000, scoped, tag = 'scratch operand']
  #allocation3 [shape = 'bf16[4,8,8]{2,1,0:T(8,128)(2,1)}', space=vmem, size = 0x2000, scoped, tag = 'scratch operand']
  %s0 = inlined_call_operand.hbm [shape: f32[2,8,32], index: 0, kind: input, shape index: {}]
  %s1 = inlined_call_operand.hbm [shape: bf16[32,96], index: 1, kind: input, shape index: {}]
  %s2 = inlined_call_operand.vmem [shape: f32[1,96], index: 2, kind: input, shape index: {}]
  %s3 = inlined_call_operand.hbm [shape: bf16[32,32], index: 3, kind: input, shape index: {}]
  %s4 = inlined_call_operand.vmem [shape: f32[1,32], index: 4, kind: input, shape index: {}]
  %s5 = inlined_call_operand.vmem [shape: f32[1,32], index: 5, kind: input, shape index: {}]
  %s6 = inlined_call_operand.vmem [shape: f32[1,32], index: 6, kind: input, shape index: {}]
  %s7 = inlined_call_operand.hbm [shape: f32[2,8,32], index: 7, kind: output, shape index: {}]
  %s8 = sld [smem:[#allocation0]]
  $region80: #{tpu_custom_call.1} parent=0
    _
  %s10 = ssub.s32 1, %s8
  %s11 = scalar_select 0, %s10, %s8
  $region1: #{tpu_custom_call.1} parent=0
    #allocation4 [shape = 'u8[8192]{0}', space=vmem, size = 0x2000, scoped, tag = 'input window, operand 0']
    #allocation5 [shape = 's32[2]{0}', space=sflag, size = 0x8, scoped, tag = 'scoped memory for tpu_custom_call.1']
    #allocation6 [shape = 's32[2]{0}', space=sflag, size = 0x8, scoped, tag = 'scoped memory for tpu_custom_call.1']
    #allocation7 [shape = 'u8[8192]{0}', space=vmem, size = 0x2000, scoped, tag = 'input window, operand 1, single buffered']
    #allocation8 [shape = 's32[1]{0}', space=sflag, size = 0x4, scoped, tag = 'scoped memory for tpu_custom_call.1']
    #allocation9 [shape = 'u8[8192]{0}', space=vmem, size = 0x2000, scoped, tag = 'input window, operand 3, single buffered']
    #allocation10 [shape = 'u8[8192]{0}', space=vmem, size = 0x2000, scoped, tag = 'output window, operand 0']
    %12 = vsyncpa [#allocation5], 0
    %s13 = scalar_lea.sflag [#allocation5], 1
    %14 = vsyncpa %s13, 0
    %15 = vsyncpa [#allocation8], 0
    %16 = vsyncpa [#allocation6], 0
    %s17 = scalar_lea.sflag [#allocation6], 1
    %18 = vsyncpa %s17, 0
    loop: start=0, step=1, limit=4
    $region2: #{tpu_custom_call.1} parent=1 // loop_pre_header
      _
    $region3: #{tpu_custom_call.1} parent=1 // loop_header
      %s20 = sphi 0, %s24
      %p21 = scmp.ge.s32.totalorder %s20, 4
      %s27 = sphi 0, %s39
      %s28 = sphi 0, %s35
      %s29 = sphi 0, %s27
      %s30 = sphi 0, %s28
      %s31 = sphi 0, %s29
      %s32 = sphi 0, %s30
      %s44 = sphi 0, %s46
      %s47 = sphi 0, %s44
      %s48 = sphi 0, %s47
      %s64 = sphi 0, %s48
      %s68 = sphi 0, %s68
      %s70 = sphi 0, %s68
      %s71 = sphi 0, %s70
      %s85 = sphi 0, %s71
      %s89 = sphi 0, %s89
      %s91 = sphi 0, %s89
      %s92 = sphi 0, %s91
      %s106 = sphi 0, %s92
      %s110 = sphi 0, %s110
      %s112 = sphi 0, %s110
      %s113 = sphi 0, %s112
      %s127 = sphi 0, %s113
      %s131 = sphi 0, %s131
      %s133 = sphi 0, %s131
      %s134 = sphi 0, %s133
      %s148 = sphi 0, %s134
      %s152 = sphi 0, %s152
      %s154 = sphi 0, %s152
      %s155 = sphi 0, %s154
      %s169 = sphi 0, %s155
      %s173 = sphi 0, %s173
      %s175 = sphi 0, %s173
      %s176 = sphi 0, %s175
      %s190 = sphi 0, %s176
      %s198 = sphi 0, %s200
      %s201 = sphi 0, %s198
      %s202 = sphi 0, %s201
      %s218 = sphi 0, %s202
    $region4: #{tpu_custom_call.1} parent=1 // loop_header_branch
      %23 = sbr.rel (%p21) target = $region8
    $region5: #{tpu_custom_call.1} parent=1 // loop_body
      %s25 = ssub.s32 %s20, 1
      %s26 = ssub.s32 %s20, 2
      %s33 = sadd.s32 1, %s28
      %p34 = scmp.ge.s32.totalorder %s33, 1
      %s35 = scalar_select %p34, 0, %s33
      %s36 = sadd.s32 1, %s27
      %s37 = scalar_select %p34, %s36, %s27
      %p38 = scmp.ge.s32.totalorder %s37, 2
      %s39 = scalar_select %p38, 0, %s37
      %s40 = ssub.s32 %s27, %s39
      %s41 = ssub.s32 %s28, %s35
      %s42 = sor.u32 %s40, %s41
      %p43 = scmp.eq.s32.totalorder %s42, 0
      %s45 = sadd.s32 %s44, 1
      %s46 = scalar_select %p43, %s44, %s45
      %p49 = pneg %p43
      %p50 = scmp.eq.s32.totalorder %s20, 1
      %p51 = por %p49, %p50
      %p52 = scmp.ne.s32.totalorder %s44, %s47
      %p53 = scmp.eq.s32.totalorder %s20, 0
      %p54 = por %p52, %p53
      %p55 = scmp.ne.s32.totalorder %s44, %s47
      %p56 = scmp.eq.s32.totalorder %s25, 1
      %p57 = por %p55, %p56
      %p58 = scmp.ne.s32.totalorder %s47, %s48
      %p59 = scmp.eq.s32.totalorder %s25, 0
      %p60 = por %p58, %p59
      %p61 = scmp.ne.s32.totalorder %s47, %s48
      %p62 = scmp.eq.s32.totalorder %s26, 1
      %p63 = por %p61, %p62
      %p65 = scmp.ne.s32.totalorder %s48, %s64
      %p66 = scmp.eq.s32.totalorder %s26, 0
      %p67 = por %p65, %p66
      %s69 = sadd.s32 %s68, 1
      %p72 = scmp.eq.s32.totalorder %s20, 1
      %p73 = scmp.ne.s32.totalorder %s68, %s70
      %p74 = scmp.eq.s32.totalorder %s20, 0
      %p75 = por %p73, %p74
      %p76 = scmp.ne.s32.totalorder %s68, %s70
      %p77 = scmp.eq.s32.totalorder %s25, 1
      %p78 = por %p76, %p77
      %p79 = scmp.ne.s32.totalorder %s70, %s71
      %p80 = scmp.eq.s32.totalorder %s25, 0
      %p81 = por %p79, %p80
      %p82 = scmp.ne.s32.totalorder %s70, %s71
      %p83 = scmp.eq.s32.totalorder %s26, 1
      %p84 = por %p82, %p83
      %p86 = scmp.ne.s32.totalorder %s71, %s85
      %p87 = scmp.eq.s32.totalorder %s26, 0
      %p88 = por %p86, %p87
      %s90 = sadd.s32 %s89, 1
      %p93 = scmp.eq.s32.totalorder %s20, 1
      %p94 = scmp.ne.s32.totalorder %s89, %s91
      %p95 = scmp.eq.s32.totalorder %s20, 0
      %p96 = por %p94, %p95
      %p97 = scmp.ne.s32.totalorder %s89, %s91
      %p98 = scmp.eq.s32.totalorder %s25, 1
      %p99 = por %p97, %p98
      %p100 = scmp.ne.s32.totalorder %s91, %s92
      %p101 = scmp.eq.s32.totalorder %s25, 0
      %p102 = por %p100, %p101
      %p103 = scmp.ne.s32.totalorder %s91, %s92
      %p104 = scmp.eq.s32.totalorder %s26, 1
      %p105 = por %p103, %p104
      %p107 = scmp.ne.s32.totalorder %s92, %s106
      %p108 = scmp.eq.s32.totalorder %s26, 0
      %p109 = por %p107, %p108
      %s111 = sadd.s32 %s110, 1
      %p114 = scmp.eq.s32.totalorder %s20, 1
      %p115 = scmp.ne.s32.totalorder %s110, %s112
      %p116 = scmp.eq.s32.totalorder %s20, 0
      %p117 = por %p115, %p116
      %p118 = scmp.ne.s32.totalorder %s110, %s112
      %p119 = scmp.eq.s32.totalorder %s25, 1
      %p120 = por %p118, %p119
      %p121 = scmp.ne.s32.totalorder %s112, %s113
      %p122 = scmp.eq.s32.totalorder %s25, 0
      %p123 = por %p121, %p122
      %p124 = scmp.ne.s32.totalorder %s112, %s113
      %p125 = scmp.eq.s32.totalorder %s26, 1
      %p126 = por %p124, %p125
      %p128 = scmp.ne.s32.totalorder %s113, %s127
      %p129 = scmp.eq.s32.totalorder %s26, 0
      %p130 = por %p128, %p129
      %s132 = sadd.s32 %s131, 1
      %p135 = scmp.eq.s32.totalorder %s20, 1
      %p136 = scmp.ne.s32.totalorder %s131, %s133
      %p137 = scmp.eq.s32.totalorder %s20, 0
      %p138 = por %p136, %p137
      %p139 = scmp.ne.s32.totalorder %s131, %s133
      %p140 = scmp.eq.s32.totalorder %s25, 1
      %p141 = por %p139, %p140
      %p142 = scmp.ne.s32.totalorder %s133, %s134
      %p143 = scmp.eq.s32.totalorder %s25, 0
      %p144 = por %p142, %p143
      %p145 = scmp.ne.s32.totalorder %s133, %s134
      %p146 = scmp.eq.s32.totalorder %s26, 1
      %p147 = por %p145, %p146
      %p149 = scmp.ne.s32.totalorder %s134, %s148
      %p150 = scmp.eq.s32.totalorder %s26, 0
      %p151 = por %p149, %p150
      %s153 = sadd.s32 %s152, 1
      %p156 = scmp.eq.s32.totalorder %s20, 1
      %p157 = scmp.ne.s32.totalorder %s152, %s154
      %p158 = scmp.eq.s32.totalorder %s20, 0
      %p159 = por %p157, %p158
      %p160 = scmp.ne.s32.totalorder %s152, %s154
      %p161 = scmp.eq.s32.totalorder %s25, 1
      %p162 = por %p160, %p161
      %p163 = scmp.ne.s32.totalorder %s154, %s155
      %p164 = scmp.eq.s32.totalorder %s25, 0
      %p165 = por %p163, %p164
      %p166 = scmp.ne.s32.totalorder %s154, %s155
      %p167 = scmp.eq.s32.totalorder %s26, 1
      %p168 = por %p166, %p167
      %p170 = scmp.ne.s32.totalorder %s155, %s169
      %p171 = scmp.eq.s32.totalorder %s26, 0
      %p172 = por %p170, %p171
      %s174 = sadd.s32 %s173, 1
      %p177 = scmp.eq.s32.totalorder %s20, 1
      %p178 = scmp.ne.s32.totalorder %s173, %s175
      %p179 = scmp.eq.s32.totalorder %s20, 0
      %p180 = por %p178, %p179
      %p181 = scmp.ne.s32.totalorder %s173, %s175
      %p182 = scmp.eq.s32.totalorder %s25, 1
      %p183 = por %p181, %p182
      %p184 = scmp.ne.s32.totalorder %s175, %s176
      %p185 = scmp.eq.s32.totalorder %s25, 0
      %p186 = por %p184, %p185
      %p187 = scmp.ne.s32.totalorder %s175, %s176
      %p188 = scmp.eq.s32.totalorder %s26, 1
      %p189 = por %p187, %p188
      %p191 = scmp.ne.s32.totalorder %s176, %s190
      %p192 = scmp.eq.s32.totalorder %s26, 0
      %p193 = por %p191, %p192
      %s194 = ssub.s32 %s27, %s39
      %s195 = ssub.s32 %s28, %s35
      %s196 = sor.u32 %s194, %s195
      %p197 = scmp.eq.s32.totalorder %s196, 0
      %s199 = sadd.s32 %s198, 1
      %s200 = scalar_select %p197, %s198, %s199
      %p203 = pneg %p197
      %p204 = scmp.eq.s32.totalorder %s20, 1
      %p205 = por %p203, %p204
      %p206 = scmp.ne.s32.totalorder %s198, %s201
      %p207 = scmp.eq.s32.totalorder %s20, 0
      %p208 = por %p206, %p207
      %p209 = scmp.ne.s32.totalorder %s198, %s201
      %p210 = scmp.eq.s32.totalorder %s25, 1
      %p211 = por %p209, %p210
      %p212 = scmp.ne.s32.totalorder %s201, %s202
      %p213 = scmp.eq.s32.totalorder %s25, 0
      %p214 = por %p212, %p213
      %p215 = scmp.ne.s32.totalorder %s201, %s202
      %p216 = scmp.eq.s32.totalorder %s26, 1
      %p217 = por %p215, %p216
      %p219 = scmp.ne.s32.totalorder %s202, %s218
      %p220 = scmp.eq.s32.totalorder %s26, 0
      %p221 = por %p219, %p220
      %p222 = scmp.le.s32.totalorder 1, %s20
      %p223 = scmp.lt.s32.totalorder %s20, 3
      %p224 = pnand %p222, %p223
      %p225 = pneg %p224
      // Predicated region
      $region9: #{tpu_custom_call.1} parent=5 // pred_check
        _
      $region10: #{tpu_custom_call.1} parent=5 // pred_check_branch
        %227 = sbr.rel (%p224) target = $region12
      $region11: #{tpu_custom_call.1} parent=5 // pred_region
        %s228 = ssub.s32 %s20, 1
        // Predicated region
        $region13: #{tpu_custom_call.1} parent=11 // pred_check
          %p229 = pneg %p81
        $region14: #{tpu_custom_call.1} parent=11 // pred_check_branch
          %231 = sbr.rel (%p229) target = $region16
        $region15: #{tpu_custom_call.1} parent=11 // pred_region
          %s233 = ssub.s32 256, 256
          %234 = vsyncadd [#allocation8], %s233
          %s235 = sshll.u32 [#allocation7], 4
          %s236 = int_to_ptr.vmem [resolvable:$true] %s235
          %241 = dma.hbm_to_vmem [thread:$0]  %s1, 256, %s236, [#allocation8], 64, 64, 4
        $region16: #{tpu_custom_call.1} parent=11 // pred_fallthru
          _
        // Predicated region
        $region17: #{tpu_custom_call.1} parent=11 // pred_check
          %p242 = pneg %p102
        $region18: #{tpu_custom_call.1} parent=11 // pred_check_branch
          %244 = sbr.rel (%p242) target = $region20
        $region19: #{tpu_custom_call.1} parent=11 // pred_region
          _
        $region20: #{tpu_custom_call.1} parent=11 // pred_fallthru
          _
        // Predicated region
        $region21: #{tpu_custom_call.1} parent=11 // pred_check
          %p245 = pneg %p123
        $region22: #{tpu_custom_call.1} parent=11 // pred_check_branch
          %247 = sbr.rel (%p245) target = $region24
        $region23: #{tpu_custom_call.1} parent=11 // pred_region
          %s249 = ssub.s32 256, 256
          %250 = vsyncadd [#allocation8], %s249
          %s251 = sshll.u32 [#allocation9], 4
          %s252 = int_to_ptr.vmem [resolvable:$true] %s251
          %257 = dma.hbm_to_vmem [thread:$0]  %s3, 256, %s252, [#allocation8], 64, 64, 4
        $region24: #{tpu_custom_call.1} parent=11 // pred_fallthru
          _
        // Predicated region
        $region25: #{tpu_custom_call.1} parent=11 // pred_check
          %p258 = pneg %p144
        $region26: #{tpu_custom_call.1} parent=11 // pred_check_branch
          %260 = sbr.rel (%p258) target = $region28
        $region27: #{tpu_custom_call.1} parent=11 // pred_region
          _
        $region28: #{tpu_custom_call.1} parent=11 // pred_fallthru
          _
        // Predicated region
        $region29: #{tpu_custom_call.1} parent=11 // pred_check
          %p261 = pneg %p165
        $region30: #{tpu_custom_call.1} parent=11 // pred_check_branch
          %263 = sbr.rel (%p261) target = $region32
        $region31: #{tpu_custom_call.1} parent=11 // pred_region
          _
        $region32: #{tpu_custom_call.1} parent=11 // pred_fallthru
          _
        // Predicated region
        $region33: #{tpu_custom_call.1} parent=11 // pred_check
          %p264 = pneg %p186
        $region34: #{tpu_custom_call.1} parent=11 // pred_check_branch
          %266 = sbr.rel (%p264) target = $region36
        $region35: #{tpu_custom_call.1} parent=11 // pred_region
          _
        $region36: #{tpu_custom_call.1} parent=11 // pred_fallthru
          _
      $region12: #{tpu_custom_call.1} parent=5 // pred_fallthru
        _
      %p267 = scmp.lt.s32.totalorder %s20, 2
      // Predicated region
      $region37: #{tpu_custom_call.1} parent=5 // pred_check
        %p268 = pneg %p267
      $region38: #{tpu_custom_call.1} parent=5 // pred_check_branch
        %270 = sbr.rel (%p268) target = $region40
      $region39: #{tpu_custom_call.1} parent=5 // pred_region
        // Predicated region
        $region41: #{tpu_custom_call.1} parent=39 // pred_check
          %p271 = pneg %p54
        $region42: #{tpu_custom_call.1} parent=39 // pred_check_branch
          %273 = sbr.rel (%p271) target = $region44
        $region43: #{tpu_custom_call.1} parent=39 // pred_region
          %s274 = sand.u32 %s44, 1
          %s275 = scalar_lea.sflag [#allocation5], %s274
          %s276 = sand.u32 %s44, 1
          %s277 = smul.addr %s276, 8
          %s278 = scalar_lea.vmem [#allocation4], %s277
          %s280 = ssub.s32 128, 128
          %281 = vsyncadd %s275, %s280
          %s282 = sadd.s32 %s28, %s27
          %s283 = smul.addr %s282, 128
          %s284 = scalar_lea.hbm %s0, %s283
          %s286 = sshll.u32 %s278, 4
          %s287 = int_to_ptr.vmem [resolvable:$true] %s286
          %289 = dma.hbm_to_vmem [thread:$0]  %s284, 128, %s287, %s275
        $region44: #{tpu_custom_call.1} parent=39 // pred_fallthru
          _
      $region40: #{tpu_custom_call.1} parent=5 // pred_fallthru
        _
      %p290 = scmp.le.s32.totalorder 1, %s20
      %p291 = scmp.lt.s32.totalorder %s20, 3
      %p292 = pnand %p290, %p291
      %p293 = pneg %p292
      // Predicated region
      $region45: #{tpu_custom_call.1} parent=5 // pred_check
        _
      $region46: #{tpu_custom_call.1} parent=5 // pred_check_branch
        %295 = sbr.rel (%p292) target = $region48
      $region47: #{tpu_custom_call.1} parent=5 // pred_region
        %s296 = ssub.s32 %s20, 1
        %s297 = sand.u32 %s47, 1
        %s298 = scalar_lea.sflag [#allocation5], %s297
        %s299 = sand.u32 %s47, 1
        %s300 = smul.addr %s299, 8
        %s301 = scalar_lea.vmem [#allocation4], %s300
        // Predicated region
        $region49: #{tpu_custom_call.1} parent=47 // pred_check
          %p302 = pneg %p60
        $region50: #{tpu_custom_call.1} parent=47 // pred_check_branch
          %304 = sbr.rel (%p302) target = $region52
        $region51: #{tpu_custom_call.1} parent=47 // pred_region
          %305 = dma.done %s298, 128
        $region52: #{tpu_custom_call.1} parent=47 // pred_fallthru
          _
        // Predicated region
        $region53: #{tpu_custom_call.1} parent=47 // pred_check
          %p306 = pneg %p81
        $region54: #{tpu_custom_call.1} parent=47 // pred_check_branch
          %308 = sbr.rel (%p306) target = $region56
        $region55: #{tpu_custom_call.1} parent=47 // pred_region
          %309 = dma.done [#allocation8], 256
        $region56: #{tpu_custom_call.1} parent=47 // pred_fallthru
          _
        // Predicated region
        $region57: #{tpu_custom_call.1} parent=47 // pred_check
          %p310 = pneg %p123
        $region58: #{tpu_custom_call.1} parent=47 // pred_check_branch
          %312 = sbr.rel (%p310) target = $region60
        $region59: #{tpu_custom_call.1} parent=47 // pred_region
          %313 = dma.done [#allocation8], 256
        $region60: #{tpu_custom_call.1} parent=47 // pred_fallthru
          _
        %s314 = sand.u32 %s47, 1
        %s315 = scalar_lea.sflag [#allocation5], %s314
        %s316 = sand.u32 %s47, 1
        %s317 = smul.addr %s316, 8
        %s318 = scalar_lea.vmem [#allocation4], %s317
        %p319 = pneg %p60
        %p320 = pneg %p57
        %p321 = pneg %p81
        %p322 = pneg %p78
        %p323 = pneg %p102
        %p324 = pneg %p99
        %p325 = pneg %p123
        %p326 = pneg %p120
        %p327 = pneg %p144
        %p328 = pneg %p141
        %p329 = pneg %p165
        %p330 = pneg %p162
        %p331 = pneg %p186
        %p332 = pneg %p183
        %p333 = pneg %p214
        %p334 = pneg %p211
        %s335 = sand.u32 %s201, 1
        %s336 = scalar_lea.sflag [#allocation6], %s335
        %s337 = sand.u32 %s201, 1
        %s338 = smul.addr %s337, 8
        %s339 = scalar_lea.vmem [#allocation10], %s338
        %s341 = smul.u32 %s30, 8
        %v342 = vld [vmem:[%s301] sm:$0xff]
        %v343 = vpack.c.bf16 %v342, %v342
        %v344 = vld [vmem:[#allocation7] sm:$0xf]
        %v345 = vld [vmem:[#allocation7 + $0x4] sm:$0xf]
        %v346 = vld [vmem:[#allocation7 + $0x8] sm:$0xf]
        %v347 = vld [vmem:[#allocation7 + $0xc] sm:$0xf]
        %v348 = vld [vmem:[%s2] sm:$0x1]
        %v350 = vlaneseq
        %v351 = vshrl.u32 %v350, 7
        %v352 = vsub.s32 0, %v351
        %v353 = vrot.slane %v348, %v352
        %v359 = vunpack.c.l.b16 %v344
        %v360 = vunpack.c.l.b16 %v345
        %v361 = vunpack.c.l.b16 %v346
        %v362 = vunpack.c.l.b16 %v347
        %v363 = vpack.c.b16 %v360, %v359
        %v364 = vpack.c.b16 %v362, %v361
        %vm367 = vcmask 261120
        %v369 = vsel %vm367, %v343, 0
        %371 = vmatprep.subr.bf16.mxu0 0
        %372 = vmatpush1.bf16.msra.mxu0 0
        %373 = vmatprep.subr.bf16.mxu0 0
        %374 = vmatpush1.bf16.msra.mxu0 0
        %375 = vmatprep.subr.bf16.mxu0 0
        %376 = vmatpush1.bf16.msra.mxu0 0
        %377 = vmatprep.subr.bf16.mxu0 0
        %378 = vmatpush1.bf16.msra.mxu0 0
        %379 = vmatprep.subr.bf16.mxu0 0
        %380 = vmatpush1.bf16.msra.mxu0 0
        %381 = vmatprep.subr.bf16.mxu0 0
        %382 = vmatpush1.bf16.msra.mxu0 0
        %383 = vmatprep.subr.bf16.mxu0 0
        %384 = vmatpush1.bf16.msra.mxu0 %v364
        %385 = vmatprep.subr.bf16.mxu0 0
        %386 = vmatpush1.bf16.msra.mxu0 %v363
        %387 = vmatprep.subr.bf16.mxu0 0
        %388 = vmatpush2.bf16.msra.mxu0 0
        %389 = vmatprep.subr.bf16.mxu0 0
        %390 = vmatpush2.bf16.msra.mxu0 0
        %391 = vmatprep.subr.bf16.mxu0 0
        %392 = vmatpush2.bf16.msra.mxu0 0
        %393 = vmatprep.subr.bf16.mxu0 0
        %394 = vmatpush2.bf16.msra.mxu0 0
        %395 = vmatprep.subr.bf16.mxu0 0
        %396 = vmatpush2.bf16.msra.mxu0 0
        %397 = vmatprep.subr.bf16.mxu0 0
        %398 = vmatpush2.bf16.msra.mxu0 0
        %399 = vmatprep.subr.bf16.mxu0 0
        %400 = vmatpush2.bf16.msra.mxu0 0
        %401 = vmatprep.subr.bf16.mxu0 0
        %402 = vmatpush2.bf16.msra.mxu0 0
        %403 = vmatprep.mubr.bf16.mxu0 0
        %404 = vmatmul.mubr.bf16.gmra.mxu0 %v369
        %v405 = vpop.f32.mrf.mxu0
        %v406 = vadd.f32 %v353, %v405
        %v407 = vpop.f32.mrf.mxu0
        %v408 = vpop.f32.mrf.mxu0
        %v409 = vpop.f32.mrf.mxu0
        %410 = vdwg.mxu0
        %412 = vrot.lane.b32.xlu0 %v406, 120
        %v413 = vpop.permute.xlu0 %412
        %415 = vrot.lane.b32.xlu0 %v406, 112
        %v416 = vpop.permute.xlu0 %415
        %418 = vrot.lane.b32.xlu0 %v406, 104
        %v419 = vpop.permute.xlu0 %418
        %v421 = vcombine.low %v406, %v416
        %v422 = vcombine.high %v406, %v416
        %v424 = vunpack.c.l.s4 1983009808
        %v425 = vunpack.c.0.s8 %v424
        %v426 = vlaneseq
        %v427 = vshrl.u32 %v426, 7
        %v428 = vsub.s32 %v425, %v427
        %v429 = vrot.slane %v421, %v428
        %v431 = vunpack.c.l.s4 1983009808
        %v432 = vunpack.c.0.s8 %v431
        %v433 = vlaneseq
        %v434 = vshrl.u32 %v433, 7
        %v435 = vsub.s32 %v432, %v434
        %v436 = vrot.slane %v422, %v435
        %v437 = vcombine.low %v413, %v419
        %v438 = vcombine.high %v413, %v419
        %v440 = vunpack.c.l.s4 1983009808
        %v441 = vunpack.c.0.s8 %v440
        %v442 = vlaneseq
        %v443 = vshrl.u32 %v442, 7
        %v444 = vsub.s32 %v441, %v443
        %v445 = vrot.slane %v437, %v444
        %v447 = vunpack.c.l.s4 1983009808
        %v448 = vunpack.c.0.s8 %v447
        %v449 = vlaneseq
        %v450 = vshrl.u32 %v449, 7
        %v451 = vsub.s32 %v448, %v450
        %v452 = vrot.slane %v438, %v451
        %v453 = vcombine.low %v429, %v445
        %v454 = vcombine.high %v429, %v445
        %v456 = vunpack.c.l.s4 1934713408
        %v457 = vunpack.c.0.s8 %v456
        %v458 = vlaneseq
        %v459 = vshrl.u32 %v458, 7
        %v460 = vsub.s32 %v457, %v459
        %v461 = vrot.slane %v453, %v460
        %v463 = vunpack.c.l.s4 1934713408
        %v464 = vunpack.c.0.s8 %v463
        %v465 = vlaneseq
        %v466 = vshrl.u32 %v465, 7
        %v467 = vsub.s32 %v464, %v466
        %v468 = vrot.slane %v454, %v467
        %v469 = vcombine.low %v436, %v452
        %v470 = vcombine.high %v436, %v452
        %v472 = vunpack.c.l.s4 1934713408
        %v473 = vunpack.c.0.s8 %v472
        %v474 = vlaneseq
        %v475 = vshrl.u32 %v474, 7
        %v476 = vsub.s32 %v473, %v475
        %v477 = vrot.slane %v469, %v476
        %v479 = vunpack.c.l.s4 1934713408
        %v480 = vunpack.c.0.s8 %v479
        %v481 = vlaneseq
        %v482 = vshrl.u32 %v481, 7
        %v483 = vsub.s32 %v480, %v482
        %v484 = vrot.slane %v470, %v483
        %v485 = vcombine.high %v461, 0.0
        %v486 = vcombine.high %v468, 0.0
        %v487 = vcombine.high %v477, 0.0
        %v488 = vcombine.high %v484, 0.0
        %v489 = vcombine.low %v461, %v468
        %v491 = vunpack.c.l.s4 1983009808
        %v492 = vunpack.c.0.s8 %v491
        %v493 = vlaneseq
        %v494 = vshrl.u32 %v493, 7
        %v495 = vsub.s32 %v492, %v494
        %v496 = vrot.slane %v489, %v495
        %v497 = vcombine.low %v485, %v486
        %v499 = vunpack.c.l.s4 1983009808
        %v500 = vunpack.c.0.s8 %v499
        %v501 = vlaneseq
        %v502 = vshrl.u32 %v501, 7
        %v503 = vsub.s32 %v500, %v502
        %v504 = vrot.slane %v497, %v503
        %v505 = vcombine.low %v477, %v484
        %v507 = vunpack.c.l.s4 1983009808
        %v508 = vunpack.c.0.s8 %v507
        %v509 = vlaneseq
        %v510 = vshrl.u32 %v509, 7
        %v511 = vsub.s32 %v508, %v510
        %v512 = vrot.slane %v505, %v511
        %v513 = vcombine.low %v487, %v488
        %v515 = vunpack.c.l.s4 1983009808
        %v516 = vunpack.c.0.s8 %v515
        %v517 = vlaneseq
        %v518 = vshrl.u32 %v517, 7
        %v519 = vsub.s32 %v516, %v518
        %v520 = vrot.slane %v513, %v519
        %v521 = vcombine.low %v496, %v504
        %v522 = vcombine.high %v496, %v504
        %v524 = vunpack.c.l.s4 1934713408
        %v525 = vunpack.c.0.s8 %v524
        %v526 = vlaneseq
        %v527 = vshrl.u32 %v526, 7
        %v528 = vsub.s32 %v525, %v527
        %v529 = vrot.slane %v521, %v528
        %v531 = vunpack.c.l.s4 1934713408
        %v532 = vunpack.c.0.s8 %v531
        %v533 = vlaneseq
        %v534 = vshrl.u32 %v533, 7
        %v535 = vsub.s32 %v532, %v534
        %v536 = vrot.slane %v522, %v535
        %v537 = vcombine.low %v512, %v520
        %v538 = vcombine.high %v512, %v520
        %v540 = vunpack.c.l.s4 1934713408
        %v541 = vunpack.c.0.s8 %v540
        %v542 = vlaneseq
        %v543 = vshrl.u32 %v542, 7
        %v544 = vsub.s32 %v541, %v543
        %v545 = vrot.slane %v537, %v544
        %v547 = vunpack.c.l.s4 1934713408
        %v548 = vunpack.c.0.s8 %v547
        %v549 = vlaneseq
        %v550 = vshrl.u32 %v549, 7
        %v551 = vsub.s32 %v548, %v550
        %v552 = vrot.slane %v538, %v551
        %v553 = vcombine.low %v529, %v545
        %v554 = vcombine.high %v529, %v545
        %v555 = vcombine.low %v536, %v552
        %v556 = vcombine.high %v536, %v552
        %v557 = vpack.c.bf16 %v553, %v553
        %v558 = vpack.c.bf16 %v554, %v554
        %v559 = vpack.c.bf16 %v555, %v555
        %v560 = vpack.c.bf16 %v556, %v556
        %561 = vrot.lane.b32.xlu0 %v406, 96
        %v562 = vpop.permute.xlu0 %561
        %563 = vrot.lane.b32.xlu0 %v413, 96
        %v564 = vpop.permute.xlu0 %563
        %565 = vrot.lane.b32.xlu0 %v416, 96
        %v566 = vpop.permute.xlu0 %565
        %567 = vrot.lane.b32.xlu0 %v419, 96
        %v568 = vpop.permute.xlu0 %567
        %v573 = vcombine.low %v562, %v566
        %v574 = vcombine.high %v562, %v566
        %v576 = vunpack.c.l.s4 1983009808
        %v577 = vunpack.c.0.s8 %v576
        %v578 = vlaneseq
        %v579 = vshrl.u32 %v578, 7
        %v580 = vsub.s32 %v577, %v579
        %v581 = vrot.slane %v573, %v580
        %v583 = vunpack.c.l.s4 1983009808
        %v584 = vunpack.c.0.s8 %v583
        %v585 = vlaneseq
        %v586 = vshrl.u32 %v585, 7
        %v587 = vsub.s32 %v584, %v586
        %v588 = vrot.slane %v574, %v587
        %v589 = vcombine.low %v564, %v568
        %v590 = vcombine.high %v564, %v568
        %v592 = vunpack.c.l.s4 1983009808
        %v593 = vunpack.c.0.s8 %v592
        %v594 = vlaneseq
        %v595 = vshrl.u32 %v594, 7
        %v596 = vsub.s32 %v593, %v595
        %v597 = vrot.slane %v589, %v596
        %v599 = vunpack.c.l.s4 1983009808
        %v600 = vunpack.c.0.s8 %v599
        %v601 = vlaneseq
        %v602 = vshrl.u32 %v601, 7
        %v603 = vsub.s32 %v600, %v602
        %v604 = vrot.slane %v590, %v603
        %v605 = vcombine.low %v581, %v597
        %v606 = vcombine.high %v581, %v597
        %v608 = vunpack.c.l.s4 1934713408
        %v609 = vunpack.c.0.s8 %v608
        %v610 = vlaneseq
        %v611 = vshrl.u32 %v610, 7
        %v612 = vsub.s32 %v609, %v611
        %v613 = vrot.slane %v605, %v612
        %v615 = vunpack.c.l.s4 1934713408
        %v616 = vunpack.c.0.s8 %v615
        %v617 = vlaneseq
        %v618 = vshrl.u32 %v617, 7
        %v619 = vsub.s32 %v616, %v618
        %v620 = vrot.slane %v606, %v619
        %v621 = vcombine.low %v588, %v604
        %v622 = vcombine.high %v588, %v604
        %v624 = vunpack.c.l.s4 1934713408
        %v625 = vunpack.c.0.s8 %v624
        %v626 = vlaneseq
        %v627 = vshrl.u32 %v626, 7
        %v628 = vsub.s32 %v625, %v627
        %v629 = vrot.slane %v621, %v628
        %v631 = vunpack.c.l.s4 1934713408
        %v632 = vunpack.c.0.s8 %v631
        %v633 = vlaneseq
        %v634 = vshrl.u32 %v633, 7
        %v635 = vsub.s32 %v632, %v634
        %v636 = vrot.slane %v622, %v635
        %v637 = vcombine.high %v613, 0.0
        %v638 = vcombine.high %v620, 0.0
        %v639 = vcombine.high %v629, 0.0
        %v640 = vcombine.high %v636, 0.0
        %v641 = vcombine.low %v613, %v620
        %v643 = vunpack.c.l.s4 1983009808
        %v644 = vunpack.c.0.s8 %v643
        %v645 = vlaneseq
        %v646 = vshrl.u32 %v645, 7
        %v647 = vsub.s32 %v644, %v646
        %v648 = vrot.slane %v641, %v647
        %v649 = vcombine.low %v637, %v638
        %v651 = vunpack.c.l.s4 1983009808
        %v652 = vunpack.c.0.s8 %v651
        %v653 = vlaneseq
        %v654 = vshrl.u32 %v653, 7
        %v655 = vsub.s32 %v652, %v654
        %v656 = vrot.slane %v649, %v655
        %v657 = vcombine.low %v629, %v636
        %v659 = vunpack.c.l.s4 1983009808
        %v660 = vunpack.c.0.s8 %v659
        %v661 = vlaneseq
        %v662 = vshrl.u32 %v661, 7
        %v663 = vsub.s32 %v660, %v662
        %v664 = vrot.slane %v657, %v663
        %v665 = vcombine.low %v639, %v640
        %v667 = vunpack.c.l.s4 1983009808
        %v668 = vunpack.c.0.s8 %v667
        %v669 = vlaneseq
        %v670 = vshrl.u32 %v669, 7
        %v671 = vsub.s32 %v668, %v670
        %v672 = vrot.slane %v665, %v671
        %v673 = vcombine.low %v648, %v656
        %v674 = vcombine.high %v648, %v656
        %v676 = vunpack.c.l.s4 1934713408
        %v677 = vunpack.c.0.s8 %v676
        %v678 = vlaneseq
        %v679 = vshrl.u32 %v678, 7
        %v680 = vsub.s32 %v677, %v679
        %v681 = vrot.slane %v673, %v680
        %v683 = vunpack.c.l.s4 1934713408
        %v684 = vunpack.c.0.s8 %v683
        %v685 = vlaneseq
        %v686 = vshrl.u32 %v685, 7
        %v687 = vsub.s32 %v684, %v686
        %v688 = vrot.slane %v674, %v687
        %v689 = vcombine.low %v664, %v672
        %v690 = vcombine.high %v664, %v672
        %v692 = vunpack.c.l.s4 1934713408
        %v693 = vunpack.c.0.s8 %v692
        %v694 = vlaneseq
        %v695 = vshrl.u32 %v694, 7
        %v696 = vsub.s32 %v693, %v695
        %v697 = vrot.slane %v689, %v696
        %v699 = vunpack.c.l.s4 1934713408
        %v700 = vunpack.c.0.s8 %v699
        %v701 = vlaneseq
        %v702 = vshrl.u32 %v701, 7
        %v703 = vsub.s32 %v700, %v702
        %v704 = vrot.slane %v690, %v703
        %v705 = vcombine.low %v681, %v697
        %v706 = vcombine.high %v681, %v697
        %v707 = vcombine.low %v688, %v704
        %v708 = vcombine.high %v688, %v704
        %v709 = vpack.c.bf16 %v705, %v705
        %v710 = vpack.c.bf16 %v706, %v706
        %v711 = vpack.c.bf16 %v707, %v707
        %v712 = vpack.c.bf16 %v708, %v708
        %713 = vrot.lane.b32.xlu0 %v406, 64
        %v714 = vpop.permute.xlu0 %713
        %715 = vrot.lane.b32.xlu0 %v413, 64
        %v716 = vpop.permute.xlu0 %715
        %717 = vrot.lane.b32.xlu0 %v416, 64
        %v718 = vpop.permute.xlu0 %717
        %719 = vrot.lane.b32.xlu0 %v419, 64
        %v720 = vpop.permute.xlu0 %719
        %v725 = vcombine.low %v714, %v718
        %v726 = vcombine.high %v714, %v718
        %v728 = vunpack.c.l.s4 1983009808
        %v729 = vunpack.c.0.s8 %v728
        %v730 = vlaneseq
        %v731 = vshrl.u32 %v730, 7
        %v732 = vsub.s32 %v729, %v731
        %v733 = vrot.slane %v725, %v732
        %v735 = vunpack.c.l.s4 1983009808
        %v736 = vunpack.c.0.s8 %v735
        %v737 = vlaneseq
        %v738 = vshrl.u32 %v737, 7
        %v739 = vsub.s32 %v736, %v738
        %v740 = vrot.slane %v726, %v739
        %v741 = vcombine.low %v716, %v720
        %v742 = vcombine.high %v716, %v720
        %v744 = vunpack.c.l.s4 1983009808
        %v745 = vunpack.c.0.s8 %v744
        %v746 = vlaneseq
        %v747 = vshrl.u32 %v746, 7
        %v748 = vsub.s32 %v745, %v747
        %v749 = vrot.slane %v741, %v748
        %v751 = vunpack.c.l.s4 1983009808
        %v752 = vunpack.c.0.s8 %v751
        %v753 = vlaneseq
        %v754 = vshrl.u32 %v753, 7
        %v755 = vsub.s32 %v752, %v754
        %v756 = vrot.slane %v742, %v755
        %v757 = vcombine.low %v733, %v749
        %v758 = vcombine.high %v733, %v749
        %v760 = vunpack.c.l.s4 1934713408
        %v761 = vunpack.c.0.s8 %v760
        %v762 = vlaneseq
        %v763 = vshrl.u32 %v762, 7
        %v764 = vsub.s32 %v761, %v763
        %v765 = vrot.slane %v757, %v764
        %v767 = vunpack.c.l.s4 1934713408
        %v768 = vunpack.c.0.s8 %v767
        %v769 = vlaneseq
        %v770 = vshrl.u32 %v769, 7
        %v771 = vsub.s32 %v768, %v770
        %v772 = vrot.slane %v758, %v771
        %v773 = vcombine.low %v740, %v756
        %v774 = vcombine.high %v740, %v756
        %v776 = vunpack.c.l.s4 1934713408
        %v777 = vunpack.c.0.s8 %v776
        %v778 = vlaneseq
        %v779 = vshrl.u32 %v778, 7
        %v780 = vsub.s32 %v777, %v779
        %v781 = vrot.slane %v773, %v780
        %v783 = vunpack.c.l.s4 1934713408
        %v784 = vunpack.c.0.s8 %v783
        %v785 = vlaneseq
        %v786 = vshrl.u32 %v785, 7
        %v787 = vsub.s32 %v784, %v786
        %v788 = vrot.slane %v774, %v787
        %v789 = vcombine.high %v765, 0.0
        %v790 = vcombine.high %v772, 0.0
        %v791 = vcombine.high %v781, 0.0
        %v792 = vcombine.high %v788, 0.0
        %v793 = vcombine.low %v765, %v772
        %v795 = vunpack.c.l.s4 1983009808
        %v796 = vunpack.c.0.s8 %v795
        %v797 = vlaneseq
        %v798 = vshrl.u32 %v797, 7
        %v799 = vsub.s32 %v796, %v798
        %v800 = vrot.slane %v793, %v799
        %v801 = vcombine.low %v789, %v790
        %v803 = vunpack.c.l.s4 1983009808
        %v804 = vunpack.c.0.s8 %v803
        %v805 = vlaneseq
        %v806 = vshrl.u32 %v805, 7
        %v807 = vsub.s32 %v804, %v806
        %v808 = vrot.slane %v801, %v807
        %v809 = vcombine.low %v781, %v788
        %v811 = vunpack.c.l.s4 1983009808
        %v812 = vunpack.c.0.s8 %v811
        %v813 = vlaneseq
        %v814 = vshrl.u32 %v813, 7
        %v815 = vsub.s32 %v812, %v814
        %v816 = vrot.slane %v809, %v815
        %v817 = vcombine.low %v791, %v792
        %v819 = vunpack.c.l.s4 1983009808
        %v820 = vunpack.c.0.s8 %v819
        %v821 = vlaneseq
        %v822 = vshrl.u32 %v821, 7
        %v823 = vsub.s32 %v820, %v822
        %v824 = vrot.slane %v817, %v823
        %v825 = vcombine.low %v800, %v808
        %v826 = vcombine.high %v800, %v808
        %v828 = vunpack.c.l.s4 1934713408
        %v829 = vunpack.c.0.s8 %v828
        %v830 = vlaneseq
        %v831 = vshrl.u32 %v830, 7
        %v832 = vsub.s32 %v829, %v831
        %v833 = vrot.slane %v825, %v832
        %v835 = vunpack.c.l.s4 1934713408
        %v836 = vunpack.c.0.s8 %v835
        %v837 = vlaneseq
        %v838 = vshrl.u32 %v837, 7
        %v839 = vsub.s32 %v836, %v838
        %v840 = vrot.slane %v826, %v839
        %v841 = vcombine.low %v816, %v824
        %v842 = vcombine.high %v816, %v824
        %v844 = vunpack.c.l.s4 1934713408
        %v845 = vunpack.c.0.s8 %v844
        %v846 = vlaneseq
        %v847 = vshrl.u32 %v846, 7
        %v848 = vsub.s32 %v845, %v847
        %v849 = vrot.slane %v841, %v848
        %v851 = vunpack.c.l.s4 1934713408
        %v852 = vunpack.c.0.s8 %v851
        %v853 = vlaneseq
        %v854 = vshrl.u32 %v853, 7
        %v855 = vsub.s32 %v852, %v854
        %v856 = vrot.slane %v842, %v855
        %v857 = vcombine.low %v833, %v849
        %v858 = vcombine.high %v833, %v849
        %v859 = vcombine.low %v840, %v856
        %v860 = vcombine.high %v840, %v856
        %v861 = vpack.c.bf16 %v857, %v857
        %v862 = vpack.c.bf16 %v858, %v858
        %v863 = vpack.c.bf16 %v859, %v859
        %v864 = vpack.c.bf16 %v860, %v860
        %s865 = sshra.s32 %s341, 3
        %s866 = sand.u32 %s341, 7
        %s867 = smul.addr %s865, 4
        %s868 = scalar_lea.vmem [#allocation2], %s867
        %vm869 = vcmask 60416
        %870 = vst.msk [vmem:[%s868] sm:$0xf] %vm869, %v709
        %871 = vst.msk [vmem:[%s868 + $0x4] sm:$0xf] %vm869, %v710
        %872 = vst.msk [vmem:[%s868 + $0x8] sm:$0xf] %vm869, %v711
        %873 = vst.msk [vmem:[%s868 + $0xc] sm:$0xf] %vm869, %v712
        %s874 = smul.addr %s865, 4
        %s875 = scalar_lea.vmem [#allocation3], %s874
        %876 = vst.msk [vmem:[%s875] sm:$0xf] %vm869, %v861
        %877 = vst.msk [vmem:[%s875 + $0x4] sm:$0xf] %vm869, %v862
        %878 = vst.msk [vmem:[%s875 + $0x8] sm:$0xf] %vm869, %v863
        %879 = vst.msk [vmem:[%s875 + $0xc] sm:$0xf] %vm869, %v864
        %s880 = sadd.s32 %s30, 1
        // While loop
        $region61: #{tpu_custom_call.1} parent=47 // loop_pre_header
          _
        $region62: #{tpu_custom_call.1} parent=47 // loop_header
          %s882 = sphi 0, %s884
          %p883 = scmp.ge.s32.totalorder %s882, %s880
          %v887 = vphi -1e+30, %v1130
          %v888 = vphi -1e+30, %v1131
          %v889 = vphi -1e+30, %v1132
          %v890 = vphi -1e+30, %v1133
          %v891 = vphi 0.0, %v1174
          %v892 = vphi 0.0, %v1175
          %v893 = vphi 0.0, %v1176
          %v894 = vphi 0.0, %v1177
          %v895 = vphi 0.0, %v1371
          %v896 = vphi 0.0, %v1372
          %v897 = vphi 0.0, %v1373
          %v898 = vphi 0.0, %v1374
        $region63: #{tpu_custom_call.1} parent=47 // loop_header_branch
          %886 = sbr.rel (%p883) target = $region67
        $region64: #{tpu_custom_call.1} parent=47 // loop_body
          %s899 = smul.u32 %s882, 8
          %s900 = sshra.s32 %s899, 3
          %s901 = sand.u32 %s899, 7
          %s902 = smul.addr %s900, 4
          %s903 = scalar_lea.vmem [#allocation2], %s902
          %v904 = vld [vmem:[%s903] sm:$0xf]
          %v905 = vld [vmem:[%s903 + $0x4] sm:$0xf]
          %v906 = vld [vmem:[%s903 + $0x8] sm:$0xf]
          %v907 = vld [vmem:[%s903 + $0xc] sm:$0xf]
          %s908 = smul.addr %s900, 4
          %s909 = scalar_lea.vmem [#allocation3], %s908
          %v910 = vld [vmem:[%s909] sm:$0xf]
          %v911 = vld [vmem:[%s909 + $0x4] sm:$0xf]
          %v912 = vld [vmem:[%s909 + $0x8] sm:$0xf]
          %v913 = vld [vmem:[%s909 + $0xc] sm:$0xf]
          %vm914 = vcmask 64512
          %v916 = vsel %vm914, %v557, 0
          %v919 = vsel %vm914, %v904, 0
          %921 = vmatprep.subr.bf16.mxu0 0
          %922 = vmatpush1.bf16.xpose.msra.mxu0 0
          %923 = vmatprep.subr.bf16.mxu0 0
          %924 = vmatpush1.bf16.xpose.msra.mxu0 0
          %925 = vmatprep.subr.bf16.mxu0 0
          %926 = vmatpush1.bf16.xpose.msra.mxu0 0
          %927 = vmatprep.subr.bf16.mxu0 0
          %928 = vmatpush1.bf16.xpose.msra.mxu0 0
          %929 = vmatprep.subr.bf16.mxu0 0
          %930 = vmatpush1.bf16.xpose.msra.mxu0 0
          %931 = vmatprep.subr.bf16.mxu0 0
          %932 = vmatpush1.bf16.xpose.msra.mxu0 0
          %933 = vmatprep.subr.bf16.mxu0 0
          %934 = vmatpush1.bf16.xpose.msra.mxu0 0
          %935 = vmatprep.subr.bf16.mxu0 0
          %936 = vmatpush1.bf16.xpose.msra.mxu0 %v919
          %937 = vmatprep.subr.bf16.mxu0 0
          %938 = vmatpush2.bf16.xpose.msra.mxu0 0
          %939 = vmatprep.subr.bf16.mxu0 0
          %940 = vmatpush2.bf16.xpose.msra.mxu0 0
          %941 = vmatprep.subr.bf16.mxu0 0
          %942 = vmatpush2.bf16.xpose.msra.mxu0 0
          %943 = vmatprep.subr.bf16.mxu0 0
          %944 = vmatpush2.bf16.xpose.msra.mxu0 0
          %945 = vmatprep.subr.bf16.mxu0 0
          %946 = vmatpush2.bf16.xpose.msra.mxu0 0
          %947 = vmatprep.subr.bf16.mxu0 0
          %948 = vmatpush2.bf16.xpose.msra.mxu0 0
          %949 = vmatprep.subr.bf16.mxu0 0
          %950 = vmatpush2.bf16.xpose.msra.mxu0 0
          %951 = vmatprep.subr.bf16.mxu0 0
          %952 = vmatpush2.bf16.xpose.msra.mxu0 0
          %953 = vmatprep.mubr.bf16.mxu0 0
          %954 = vmatmul.mubr.bf16.gmra.mxu0 %v916
          %v955 = vpop.f32.mrf.mxu0
          %v956 = vadd.f32 0.0, %v955
          %v957 = vpop.f32.mrf.mxu0
          %v958 = vpop.f32.mrf.mxu0
          %v959 = vpop.f32.mrf.mxu0
          %960 = vdwg.mxu0
          %v962 = vsel %vm914, %v558, 0
          %v965 = vsel %vm914, %v905, 0
          %967 = vmatprep.subr.bf16.mxu0 0
          %968 = vmatpush1.bf16.xpose.msra.mxu0 0
          %969 = vmatprep.subr.bf16.mxu0 0
          %970 = vmatpush1.bf16.xpose.msra.mxu0 0
          %971 = vmatprep.subr.bf16.mxu0 0
          %972 = vmatpush1.bf16.xpose.msra.mxu0 0
          %973 = vmatprep.subr.bf16.mxu0 0
          %974 = vmatpush1.bf16.xpose.msra.mxu0 0
          %975 = vmatprep.subr.bf16.mxu0 0
          %976 = vmatpush1.bf16.xpose.msra.mxu0 0
          %977 = vmatprep.subr.bf16.mxu0 0
          %978 = vmatpush1.bf16.xpose.msra.mxu0 0
          %979 = vmatprep.subr.bf16.mxu0 0
          %980 = vmatpush1.bf16.xpose.msra.mxu0 0
          %981 = vmatprep.subr.bf16.mxu0 0
          %982 = vmatpush1.bf16.xpose.msra.mxu0 %v965
          %983 = vmatprep.subr.bf16.mxu0 0
          %984 = vmatpush2.bf16.xpose.msra.mxu0 0
          %985 = vmatprep.subr.bf16.mxu0 0
          %986 = vmatpush2.bf16.xpose.msra.mxu0 0
          %987 = vmatprep.subr.bf16.mxu0 0
          %988 = vmatpush2.bf16.xpose.msra.mxu0 0
          %989 = vmatprep.subr.bf16.mxu0 0
          %990 = vmatpush2.bf16.xpose.msra.mxu0 0
          %991 = vmatprep.subr.bf16.mxu0 0
          %992 = vmatpush2.bf16.xpose.msra.mxu0 0
          %993 = vmatprep.subr.bf16.mxu0 0
          %994 = vmatpush2.bf16.xpose.msra.mxu0 0
          %995 = vmatprep.subr.bf16.mxu0 0
          %996 = vmatpush2.bf16.xpose.msra.mxu0 0
          %997 = vmatprep.subr.bf16.mxu0 0
          %998 = vmatpush2.bf16.xpose.msra.mxu0 0
          %999 = vmatprep.mubr.bf16.mxu0 0
          %1000 = vmatmul.mubr.bf16.gmra.mxu0 %v962
          %v1001 = vpop.f32.mrf.mxu0
          %v1002 = vadd.f32 0.0, %v1001
          %v1003 = vpop.f32.mrf.mxu0
          %v1004 = vpop.f32.mrf.mxu0
          %v1005 = vpop.f32.mrf.mxu0
          %1006 = vdwg.mxu0
          %v1008 = vsel %vm914, %v559, 0
          %v1011 = vsel %vm914, %v906, 0
          %1013 = vmatprep.subr.bf16.mxu0 0
          %1014 = vmatpush1.bf16.xpose.msra.mxu0 0
          %1015 = vmatprep.subr.bf16.mxu0 0
          %1016 = vmatpush1.bf16.xpose.msra.mxu0 0
          %1017 = vmatprep.subr.bf16.mxu0 0
          %1018 = vmatpush1.bf16.xpose.msra.mxu0 0
          %1019 = vmatprep.subr.bf16.mxu0 0
          %1020 = vmatpush1.bf16.xpose.msra.mxu0 0
          %1021 = vmatprep.subr.bf16.mxu0 0
          %1022 = vmatpush1.bf16.xpose.msra.mxu0 0
          %1023 = vmatprep.subr.bf16.mxu0 0
          %1024 = vmatpush1.bf16.xpose.msra.mxu0 0
          %1025 = vmatprep.subr.bf16.mxu0 0
          %1026 = vmatpush1.bf16.xpose.msra.mxu0 0
          %1027 = vmatprep.subr.bf16.mxu0 0
          %1028 = vmatpush1.bf16.xpose.msra.mxu0 %v1011
          %1029 = vmatprep.subr.bf16.mxu0 0
          %1030 = vmatpush2.bf16.xpose.msra.mxu0 0
          %1031 = vmatprep.subr.bf16.mxu0 0
          %1032 = vmatpush2.bf16.xpose.msra.mxu0 0
          %1033 = vmatprep.subr.bf16.mxu0 0
          %1034 = vmatpush2.bf16.xpose.msra.mxu0 0
          %1035 = vmatprep.subr.bf16.mxu0 0
          %1036 = vmatpush2.bf16.xpose.msra.mxu0 0
          %1037 = vmatprep.subr.bf16.mxu0 0
          %1038 = vmatpush2.bf16.xpose.msra.mxu0 0
          %1039 = vmatprep.subr.bf16.mxu0 0
          %1040 = vmatpush2.bf16.xpose.msra.mxu0 0
          %1041 = vmatprep.subr.bf16.mxu0 0
          %1042 = vmatpush2.bf16.xpose.msra.mxu0 0
          %1043 = vmatprep.subr.bf16.mxu0 0
          %1044 = vmatpush2.bf16.xpose.msra.mxu0 0
          %1045 = vmatprep.mubr.bf16.mxu0 0
          %1046 = vmatmul.mubr.bf16.gmra.mxu0 %v1008
          %v1047 = vpop.f32.mrf.mxu0
          %v1048 = vadd.f32 0.0, %v1047
          %v1049 = vpop.f32.mrf.mxu0
          %v1050 = vpop.f32.mrf.mxu0
          %v1051 = vpop.f32.mrf.mxu0
          %1052 = vdwg.mxu0
          %v1054 = vsel %vm914, %v560, 0
          %v1057 = vsel %vm914, %v907, 0
          %1059 = vmatprep.subr.bf16.mxu0 0
          %1060 = vmatpush1.bf16.xpose.msra.mxu0 0
          %1061 = vmatprep.subr.bf16.mxu0 0
          %1062 = vmatpush1.bf16.xpose.msra.mxu0 0
          %1063 = vmatprep.subr.bf16.mxu0 0
          %1064 = vmatpush1.bf16.xpose.msra.mxu0 0
          %1065 = vmatprep.subr.bf16.mxu0 0
          %1066 = vmatpush1.bf16.xpose.msra.mxu0 0
          %1067 = vmatprep.subr.bf16.mxu0 0
          %1068 = vmatpush1.bf16.xpose.msra.mxu0 0
          %1069 = vmatprep.subr.bf16.mxu0 0
          %1070 = vmatpush1.bf16.xpose.msra.mxu0 0
          %1071 = vmatprep.subr.bf16.mxu0 0
          %1072 = vmatpush1.bf16.xpose.msra.mxu0 0
          %1073 = vmatprep.subr.bf16.mxu0 0
          %1074 = vmatpush1.bf16.xpose.msra.mxu0 %v1057
          %1075 = vmatprep.subr.bf16.mxu0 0
          %1076 = vmatpush2.bf16.xpose.msra.mxu0 0
          %1077 = vmatprep.subr.bf16.mxu0 0
          %1078 = vmatpush2.bf16.xpose.msra.mxu0 0
          %1079 = vmatprep.subr.bf16.mxu0 0
          %1080 = vmatpush2.bf16.xpose.msra.mxu0 0
          %1081 = vmatprep.subr.bf16.mxu0 0
          %1082 = vmatpush2.bf16.xpose.msra.mxu0 0
          %1083 = vmatprep.subr.bf16.mxu0 0
          %1084 = vmatpush2.bf16.xpose.msra.mxu0 0
          %1085 = vmatprep.subr.bf16.mxu0 0
          %1086 = vmatpush2.bf16.xpose.msra.mxu0 0
          %1087 = vmatprep.subr.bf16.mxu0 0
          %1088 = vmatpush2.bf16.xpose.msra.mxu0 0
          %1089 = vmatprep.subr.bf16.mxu0 0
          %1090 = vmatpush2.bf16.xpose.msra.mxu0 0
          %1091 = vmatprep.mubr.bf16.mxu0 0
          %1092 = vmatmul.mubr.bf16.gmra.mxu0 %v1054
          %v1093 = vpop.f32.mrf.mxu0
          %v1094 = vadd.f32 0.0, %v1093
          %v1095 = vpop.f32.mrf.mxu0
          %v1096 = vpop.f32.mrf.mxu0
          %v1097 = vpop.f32.mrf.mxu0
          %1098 = vdwg.mxu0
          %v1099 = vmul.f32 %v956, 0.35355338
          %v1100 = vmul.f32 %v1002, 0.35355338
          %v1101 = vmul.f32 %v1048, 0.35355338
          %v1102 = vmul.f32 %v1094, 0.35355338
          %v1103 = vlaneseq
          %v1104 = vshrl.u32 %v1103, 7
          %v1105 = vstv %s341
          %v1106 = vadd.s32 %v1105, %v1104
          %v1107 = vlaneseq
          %v1108 = vand.u32 %v1107, 127
          %v1109 = vstv %s899
          %v1110 = vadd.s32 %v1109, %v1108
          %vm1111 = vcmp.le.s32.totalorder %v1110, %v1106
          %v1112 = vsel %vm1111, 1, 0
          %vm1113 = vcmp.eq.s32.totalorder %v1112, 1
          %v1114 = vsel %vm1113, %v1099, -1e+09
          %v1115 = vsel %vm1113, %v1100, -1e+09
          %v1116 = vsel %vm1113, %v1101, -1e+09
          %v1117 = vsel %vm1113, %v1102, -1e+09
          %v1118 = vsel %vm914, %v1114, -inf
          %1119 = vmax.xlane.f32.xlu0 %v1118
          %v1120 = vpop.xlane.xlu0 %1119
          %v1121 = vsel %vm914, %v1115, -inf
          %1122 = vmax.xlane.f32.xlu0 %v1121
          %v1123 = vpop.xlane.xlu0 %1122
          %v1124 = vsel %vm914, %v1116, -inf
          %1125 = vmax.xlane.f32.xlu0 %v1124
          %v1126 = vpop.xlane.xlu0 %1125
          %v1127 = vsel %vm914, %v1117, -inf
          %1128 = vmax.xlane.f32.xlu0 %v1127
          %v1129 = vpop.xlane.xlu0 %1128
          %v1130 = vmax.f32 %v887, %v1120
          %v1131 = vmax.f32 %v888, %v1123
          %v1132 = vmax.f32 %v889, %v1126
          %v1133 = vmax.f32 %v890, %v1129
          %v1134 = vsub.f32 %v887, %v1130
          %v1135 = vsub.f32 %v888, %v1131
          %v1136 = vsub.f32 %v889, %v1132
          %v1137 = vsub.f32 %v890, %v1133
          %v1138 = vmul.f32 %v1134, 1.442695
          %v1139 = vpow.pop %v1138
          %v1140 = vmul.f32 %v1135, 1.442695
          %v1141 = vpow.pop %v1140
          %v1142 = vmul.f32 %v1136, 1.442695
          %v1143 = vpow.pop %v1142
          %v1144 = vmul.f32 %v1137, 1.442695
          %v1145 = vpow.pop %v1144
          %v1146 = vsub.f32 %v1114, %v1130
          %v1147 = vsub.f32 %v1115, %v1131
          %v1148 = vsub.f32 %v1116, %v1132
          %v1149 = vsub.f32 %v1117, %v1133
          %v1150 = vmul.f32 %v1146, 1.442695
          %v1151 = vpow.pop %v1150
          %v1152 = vmul.f32 %v1147, 1.442695
          %v1153 = vpow.pop %v1152
          %v1154 = vmul.f32 %v1148, 1.442695
          %v1155 = vpow.pop %v1154
          %v1156 = vmul.f32 %v1149, 1.442695
          %v1157 = vpow.pop %v1156
          %v1158 = vmul.f32 %v1139, %v891
          %v1159 = vmul.f32 %v1141, %v892
          %v1160 = vmul.f32 %v1143, %v893
          %v1161 = vmul.f32 %v1145, %v894
          %v1162 = vsel %vm914, %v1151, 0.0
          %1163 = vadd.xlane.f32.xlu0 %v1162
          %v1164 = vpop.xlane.xlu0 %1163
          %v1165 = vsel %vm914, %v1153, 0.0
          %1166 = vadd.xlane.f32.xlu0 %v1165
          %v1167 = vpop.xlane.xlu0 %1166
          %v1168 = vsel %vm914, %v1155, 0.0
          %1169 = vadd.xlane.f32.xlu0 %v1168
          %v1170 = vpop.xlane.xlu0 %1169
          %v1171 = vsel %vm914, %v1157, 0.0
          %1172 = vadd.xlane.f32.xlu0 %v1171
          %v1173 = vpop.xlane.xlu0 %1172
          %v1174 = vadd.f32 %v1158, %v1164
          %v1175 = vadd.f32 %v1159, %v1167
          %v1176 = vadd.f32 %v1160, %v1170
          %v1177 = vadd.f32 %v1161, %v1173
          %v1178 = vmul.f32 %v1139, %v895
          %v1179 = vmul.f32 %v1141, %v896
          %v1180 = vmul.f32 %v1143, %v897
          %v1181 = vmul.f32 %v1145, %v898
          %v1182 = vpack.c.bf16 %v1151, %v1151
          %v1183 = vpack.c.bf16 %v1153, %v1153
          %v1184 = vpack.c.bf16 %v1155, %v1155
          %v1185 = vpack.c.bf16 %v1157, %v1157
          %v1187 = vsel %vm914, %v1182, 0
          %vm1189 = vcmask 1043456
          %v1191 = vsel %vm1189, %v910, 0
          %1193 = vmatprep.subr.bf16.mxu0 0
          %1194 = vmatpush1.bf16.msra.mxu0 0
          %1195 = vmatprep.subr.bf16.mxu0 0
          %1196 = vmatpush1.bf16.msra.mxu0 0
          %1197 = vmatprep.subr.bf16.mxu0 0
          %1198 = vmatpush1.bf16.msra.mxu0 0
          %1199 = vmatprep.subr.bf16.mxu0 0
          %1200 = vmatpush1.bf16.msra.mxu0 0
          %1201 = vmatprep.subr.bf16.mxu0 0
          %1202 = vmatpush1.bf16.msra.mxu0 0
          %1203 = vmatprep.subr.bf16.mxu0 0
          %1204 = vmatpush1.bf16.msra.mxu0 0
          %1205 = vmatprep.subr.bf16.mxu0 0
          %1206 = vmatpush1.bf16.msra.mxu0 0
          %1207 = vmatprep.subr.bf16.mxu0 0
          %1208 = vmatpush1.bf16.msra.mxu0 %v1191
          %1209 = vmatprep.subr.bf16.mxu0 0
          %1210 = vmatpush2.bf16.msra.mxu0 0
          %1211 = vmatprep.subr.bf16.mxu0 0
          %1212 = vmatpush2.bf16.msra.mxu0 0
          %1213 = vmatprep.subr.bf16.mxu0 0
          %1214 = vmatpush2.bf16.msra.mxu0 0
          %1215 = vmatprep.subr.bf16.mxu0 0
          %1216 = vmatpush2.bf16.msra.mxu0 0
          %1217 = vmatprep.subr.bf16.mxu0 0
          %1218 = vmatpush2.bf16.msra.mxu0 0
          %1219 = vmatprep.subr.bf16.mxu0 0
          %1220 = vmatpush2.bf16.msra.mxu0 0
          %1221 = vmatprep.subr.bf16.mxu0 0
          %1222 = vmatpush2.bf16.msra.mxu0 0
          %1223 = vmatprep.subr.bf16.mxu0 0
          %1224 = vmatpush2.bf16.msra.mxu0 0
          %1225 = vmatprep.mubr.bf16.mxu0 0
          %1226 = vmatmul.mubr.bf16.gmra.mxu0 %v1187
          %v1227 = vpop.f32.mrf.mxu0
          %v1228 = vadd.f32 0.0, %v1227
          %v1229 = vpop.f32.mrf.mxu0
          %v1230 = vpop.f32.mrf.mxu0
          %v1231 = vpop.f32.mrf.mxu0
          %1232 = vdwg.mxu0
          %v1234 = vsel %vm914, %v1183, 0
          %v1237 = vsel %vm1189, %v911, 0
          %1239 = vmatprep.subr.bf16.mxu0 0
          %1240 = vmatpush1.bf16.msra.mxu0 0
          %1241 = vmatprep.subr.bf16.mxu0 0
          %1242 = vmatpush1.bf16.msra.mxu0 0
          %1243 = vmatprep.subr.bf16.mxu0 0
          %1244 = vmatpush1.bf16.msra.mxu0 0
          %1245 = vmatprep.subr.bf16.mxu0 0
          %1246 = vmatpush1.bf16.msra.mxu0 0
          %1247 = vmatprep.subr.bf16.mxu0 0
          %1248 = vmatpush1.bf16.msra.mxu0 0
          %1249 = vmatprep.subr.bf16.mxu0 0
          %1250 = vmatpush1.bf16.msra.mxu0 0
          %1251 = vmatprep.subr.bf16.mxu0 0
          %1252 = vmatpush1.bf16.msra.mxu0 0
          %1253 = vmatprep.subr.bf16.mxu0 0
          %1254 = vmatpush1.bf16.msra.mxu0 %v1237
          %1255 = vmatprep.subr.bf16.mxu0 0
          %1256 = vmatpush2.bf16.msra.mxu0 0
          %1257 = vmatprep.subr.bf16.mxu0 0
          %1258 = vmatpush2.bf16.msra.mxu0 0
          %1259 = vmatprep.subr.bf16.mxu0 0
          %1260 = vmatpush2.bf16.msra.mxu0 0
          %1261 = vmatprep.subr.bf16.mxu0 0
          %1262 = vmatpush2.bf16.msra.mxu0 0
          %1263 = vmatprep.subr.bf16.mxu0 0
          %1264 = vmatpush2.bf16.msra.mxu0 0
          %1265 = vmatprep.subr.bf16.mxu0 0
          %1266 = vmatpush2.bf16.msra.mxu0 0
          %1267 = vmatprep.subr.bf16.mxu0 0
          %1268 = vmatpush2.bf16.msra.mxu0 0
          %1269 = vmatprep.subr.bf16.mxu0 0
          %1270 = vmatpush2.bf16.msra.mxu0 0
          %1271 = vmatprep.mubr.bf16.mxu0 0
          %1272 = vmatmul.mubr.bf16.gmra.mxu0 %v1234
          %v1273 = vpop.f32.mrf.mxu0
          %v1274 = vadd.f32 0.0, %v1273
          %v1275 = vpop.f32.mrf.mxu0
          %v1276 = vpop.f32.mrf.mxu0
          %v1277 = vpop.f32.mrf.mxu0
          %1278 = vdwg.mxu0
          %v1280 = vsel %vm914, %v1184, 0
          %v1283 = vsel %vm1189, %v912, 0
          %1285 = vmatprep.subr.bf16.mxu0 0
          %1286 = vmatpush1.bf16.msra.mxu0 0
          %1287 = vmatprep.subr.bf16.mxu0 0
          %1288 = vmatpush1.bf16.msra.mxu0 0
          %1289 = vmatprep.subr.bf16.mxu0 0
          %1290 = vmatpush1.bf16.msra.mxu0 0
          %1291 = vmatprep.subr.bf16.mxu0 0
          %1292 = vmatpush1.bf16.msra.mxu0 0
          %1293 = vmatprep.subr.bf16.mxu0 0
          %1294 = vmatpush1.bf16.msra.mxu0 0
          %1295 = vmatprep.subr.bf16.mxu0 0
          %1296 = vmatpush1.bf16.msra.mxu0 0
          %1297 = vmatprep.subr.bf16.mxu0 0
          %1298 = vmatpush1.bf16.msra.mxu0 0
          %1299 = vmatprep.subr.bf16.mxu0 0
          %1300 = vmatpush1.bf16.msra.mxu0 %v1283
          %1301 = vmatprep.subr.bf16.mxu0 0
          %1302 = vmatpush2.bf16.msra.mxu0 0
          %1303 = vmatprep.subr.bf16.mxu0 0
          %1304 = vmatpush2.bf16.msra.mxu0 0
          %1305 = vmatprep.subr.bf16.mxu0 0
          %1306 = vmatpush2.bf16.msra.mxu0 0
          %1307 = vmatprep.subr.bf16.mxu0 0
          %1308 = vmatpush2.bf16.msra.mxu0 0
          %1309 = vmatprep.subr.bf16.mxu0 0
          %1310 = vmatpush2.bf16.msra.mxu0 0
          %1311 = vmatprep.subr.bf16.mxu0 0
          %1312 = vmatpush2.bf16.msra.mxu0 0
          %1313 = vmatprep.subr.bf16.mxu0 0
          %1314 = vmatpush2.bf16.msra.mxu0 0
          %1315 = vmatprep.subr.bf16.mxu0 0
          %1316 = vmatpush2.bf16.msra.mxu0 0
          %1317 = vmatprep.mubr.bf16.mxu0 0
          %1318 = vmatmul.mubr.bf16.gmra.mxu0 %v1280
          %v1319 = vpop.f32.mrf.mxu0
          %v1320 = vadd.f32 0.0, %v1319
          %v1321 = vpop.f32.mrf.mxu0
          %v1322 = vpop.f32.mrf.mxu0
          %v1323 = vpop.f32.mrf.mxu0
          %1324 = vdwg.mxu0
          %v1326 = vsel %vm914, %v1185, 0
          %v1329 = vsel %vm1189, %v913, 0
          %1331 = vmatprep.subr.bf16.mxu0 0
          %1332 = vmatpush1.bf16.msra.mxu0 0
          %1333 = vmatprep.subr.bf16.mxu0 0
          %1334 = vmatpush1.bf16.msra.mxu0 0
          %1335 = vmatprep.subr.bf16.mxu0 0
          %1336 = vmatpush1.bf16.msra.mxu0 0
          %1337 = vmatprep.subr.bf16.mxu0 0
          %1338 = vmatpush1.bf16.msra.mxu0 0
          %1339 = vmatprep.subr.bf16.mxu0 0
          %1340 = vmatpush1.bf16.msra.mxu0 0
          %1341 = vmatprep.subr.bf16.mxu0 0
          %1342 = vmatpush1.bf16.msra.mxu0 0
          %1343 = vmatprep.subr.bf16.mxu0 0
          %1344 = vmatpush1.bf16.msra.mxu0 0
          %1345 = vmatprep.subr.bf16.mxu0 0
          %1346 = vmatpush1.bf16.msra.mxu0 %v1329
          %1347 = vmatprep.subr.bf16.mxu0 0
          %1348 = vmatpush2.bf16.msra.mxu0 0
          %1349 = vmatprep.subr.bf16.mxu0 0
          %1350 = vmatpush2.bf16.msra.mxu0 0
          %1351 = vmatprep.subr.bf16.mxu0 0
          %1352 = vmatpush2.bf16.msra.mxu0 0
          %1353 = vmatprep.subr.bf16.mxu0 0
          %1354 = vmatpush2.bf16.msra.mxu0 0
          %1355 = vmatprep.subr.bf16.mxu0 0
          %1356 = vmatpush2.bf16.msra.mxu0 0
          %1357 = vmatprep.subr.bf16.mxu0 0
          %1358 = vmatpush2.bf16.msra.mxu0 0
          %1359 = vmatprep.subr.bf16.mxu0 0
          %1360 = vmatpush2.bf16.msra.mxu0 0
          %1361 = vmatprep.subr.bf16.mxu0 0
          %1362 = vmatpush2.bf16.msra.mxu0 0
          %1363 = vmatprep.mubr.bf16.mxu0 0
          %1364 = vmatmul.mubr.bf16.gmra.mxu0 %v1326
          %v1365 = vpop.f32.mrf.mxu0
          %v1366 = vadd.f32 0.0, %v1365
          %v1367 = vpop.f32.mrf.mxu0
          %v1368 = vpop.f32.mrf.mxu0
          %v1369 = vpop.f32.mrf.mxu0
          %1370 = vdwg.mxu0
          %v1371 = vadd.f32 %v1178, %v1228
          %v1372 = vadd.f32 %v1179, %v1274
          %v1373 = vadd.f32 %v1180, %v1320
          %v1374 = vadd.f32 %v1181, %v1366
        $region65: #{tpu_custom_call.1} parent=47 // loop_footer
          %s884 = sadd.s32 %s882, 1
        $region66: #{tpu_custom_call.1} parent=47 // loop_footer_branch
          %881 = sbr.rel target = $region62
        $region67: #{tpu_custom_call.1} parent=47 // loop_exit
          _
        %v1375 = vrcp.pop %v891
        %v1376 = vrcp.pop %v892
        %v1377 = vrcp.pop %v893
        %v1378 = vrcp.pop %v894
        %v1379 = vmul.f32 %v895, %v1375
        %v1380 = vmul.f32 %v896, %v1376
        %v1381 = vmul.f32 %v897, %v1377
        %v1382 = vmul.f32 %v898, %v1378
        %v1383 = vcombine.low %v1379, %v1381
        %v1384 = vcombine.high %v1379, %v1381
        %v1386 = vunpack.c.l.s4 1983009808
        %v1387 = vunpack.c.0.s8 %v1386
        %v1388 = vlaneseq
        %v1389 = vshrl.u32 %v1388, 7
        %v1390 = vsub.s32 %v1387, %v1389
        %v1391 = vrot.slane %v1383, %v1390
        %v1393 = vunpack.c.l.s4 1983009808
        %v1394 = vunpack.c.0.s8 %v1393
        %v1395 = vlaneseq
        %v1396 = vshrl.u32 %v1395, 7
        %v1397 = vsub.s32 %v1394, %v1396
        %v1398 = vrot.slane %v1384, %v1397
        %v1399 = vcombine.low %v1380, %v1382
        %v1400 = vcombine.high %v1380, %v1382
        %v1402 = vunpack.c.l.s4 1983009808
        %v1403 = vunpack.c.0.s8 %v1402
        %v1404 = vlaneseq
        %v1405 = vshrl.u32 %v1404, 7
        %v1406 = vsub.s32 %v1403, %v1405
        %v1407 = vrot.slane %v1399, %v1406
        %v1409 = vunpack.c.l.s4 1983009808
        %v1410 = vunpack.c.0.s8 %v1409
        %v1411 = vlaneseq
        %v1412 = vshrl.u32 %v1411, 7
        %v1413 = vsub.s32 %v1410, %v1412
        %v1414 = vrot.slane %v1400, %v1413
        %v1415 = vcombine.low %v1391, %v1407
        %v1416 = vcombine.high %v1391, %v1407
        %v1418 = vunpack.c.l.s4 1934713408
        %v1419 = vunpack.c.0.s8 %v1418
        %v1420 = vlaneseq
        %v1421 = vshrl.u32 %v1420, 7
        %v1422 = vsub.s32 %v1419, %v1421
        %v1423 = vrot.slane %v1415, %v1422
        %v1425 = vunpack.c.l.s4 1934713408
        %v1426 = vunpack.c.0.s8 %v1425
        %v1427 = vlaneseq
        %v1428 = vshrl.u32 %v1427, 7
        %v1429 = vsub.s32 %v1426, %v1428
        %v1430 = vrot.slane %v1416, %v1429
        %v1431 = vcombine.low %v1398, %v1414
        %v1432 = vcombine.high %v1398, %v1414
        %v1434 = vunpack.c.l.s4 1934713408
        %v1435 = vunpack.c.0.s8 %v1434
        %v1436 = vlaneseq
        %v1437 = vshrl.u32 %v1436, 7
        %v1438 = vsub.s32 %v1435, %v1437
        %v1439 = vrot.slane %v1431, %v1438
        %v1441 = vunpack.c.l.s4 1934713408
        %v1442 = vunpack.c.0.s8 %v1441
        %v1443 = vlaneseq
        %v1444 = vshrl.u32 %v1443, 7
        %v1445 = vsub.s32 %v1442, %v1444
        %v1446 = vrot.slane %v1432, %v1445
        %v1447 = vcombine.high %v1423, 0.0
        %v1448 = vcombine.high %v1430, 0.0
        %v1449 = vcombine.high %v1439, 0.0
        %v1450 = vcombine.high %v1446, 0.0
        %v1451 = vcombine.low %v1423, %v1430
        %v1453 = vunpack.c.l.s4 1983009808
        %v1454 = vunpack.c.0.s8 %v1453
        %v1455 = vlaneseq
        %v1456 = vshrl.u32 %v1455, 7
        %v1457 = vsub.s32 %v1454, %v1456
        %v1458 = vrot.slane %v1451, %v1457
        %v1459 = vcombine.low %v1447, %v1448
        %v1461 = vunpack.c.l.s4 1983009808
        %v1462 = vunpack.c.0.s8 %v1461
        %v1463 = vlaneseq
        %v1464 = vshrl.u32 %v1463, 7
        %v1465 = vsub.s32 %v1462, %v1464
        %v1466 = vrot.slane %v1459, %v1465
        %v1467 = vcombine.low %v1439, %v1446
        %v1469 = vunpack.c.l.s4 1983009808
        %v1470 = vunpack.c.0.s8 %v1469
        %v1471 = vlaneseq
        %v1472 = vshrl.u32 %v1471, 7
        %v1473 = vsub.s32 %v1470, %v1472
        %v1474 = vrot.slane %v1467, %v1473
        %v1475 = vcombine.low %v1449, %v1450
        %v1477 = vunpack.c.l.s4 1983009808
        %v1478 = vunpack.c.0.s8 %v1477
        %v1479 = vlaneseq
        %v1480 = vshrl.u32 %v1479, 7
        %v1481 = vsub.s32 %v1478, %v1480
        %v1482 = vrot.slane %v1475, %v1481
        %v1483 = vcombine.low %v1458, %v1466
        %v1484 = vcombine.high %v1458, %v1466
        %v1486 = vunpack.c.l.s4 1934713408
        %v1487 = vunpack.c.0.s8 %v1486
        %v1488 = vlaneseq
        %v1489 = vshrl.u32 %v1488, 7
        %v1490 = vsub.s32 %v1487, %v1489
        %v1491 = vrot.slane %v1483, %v1490
        %v1493 = vunpack.c.l.s4 1934713408
        %v1494 = vunpack.c.0.s8 %v1493
        %v1495 = vlaneseq
        %v1496 = vshrl.u32 %v1495, 7
        %v1497 = vsub.s32 %v1494, %v1496
        %v1498 = vrot.slane %v1484, %v1497
        %v1499 = vcombine.low %v1474, %v1482
        %v1500 = vcombine.high %v1474, %v1482
        %v1502 = vunpack.c.l.s4 1934713408
        %v1503 = vunpack.c.0.s8 %v1502
        %v1504 = vlaneseq
        %v1505 = vshrl.u32 %v1504, 7
        %v1506 = vsub.s32 %v1503, %v1505
        %v1507 = vrot.slane %v1499, %v1506
        %v1509 = vunpack.c.l.s4 1934713408
        %v1510 = vunpack.c.0.s8 %v1509
        %v1511 = vlaneseq
        %v1512 = vshrl.u32 %v1511, 7
        %v1513 = vsub.s32 %v1510, %v1512
        %v1514 = vrot.slane %v1500, %v1513
        %v1515 = vcombine.low %v1491, %v1507
        %v1516 = vcombine.high %v1491, %v1507
        %v1517 = vcombine.low %v1498, %v1514
        %v1518 = vcombine.high %v1498, %v1514
        %1520 = vrot.lane.b32.xlu0 %v1516, 8
        %v1521 = vpop.permute.xlu0 %1520
        %1524 = vrot.lane.b32.xlu0 %v1517, 16
        %v1525 = vpop.permute.xlu0 %1524
        %1528 = vrot.lane.b32.xlu0 %v1518, 24
        %v1529 = vpop.permute.xlu0 %1528
        %vm1531 = vcmask 64512
        %v1532 = vsel %vm1531, %v1515, %v1521
        %vm1533 = vcmask 130048
        %v1534 = vsel %vm1533, %v1532, %v1525
        %vm1535 = vcmask 195584
        %v1536 = vsel %vm1535, %v1534, %v1529
        %v1537 = vpack.c.bf16 %v1536, %v1536
        %v1538 = vld [vmem:[#allocation9] sm:$0xf]
        %v1539 = vld [vmem:[#allocation9 + $0x4] sm:$0xf]
        %v1540 = vld [vmem:[#allocation9 + $0x8] sm:$0xf]
        %v1541 = vld [vmem:[#allocation9 + $0xc] sm:$0xf]
        %v1542 = vld [vmem:[%s4] sm:$0x1]
        %v1544 = vlaneseq
        %v1545 = vshrl.u32 %v1544, 7
        %v1546 = vsub.s32 0, %v1545
        %v1547 = vrot.slane %v1542, %v1546
        %v1553 = vunpack.c.l.b16 %v1538
        %v1554 = vunpack.c.l.b16 %v1539
        %v1555 = vunpack.c.l.b16 %v1540
        %v1556 = vunpack.c.l.b16 %v1541
        %v1557 = vpack.c.b16 %v1554, %v1553
        %v1558 = vpack.c.b16 %v1556, %v1555
        %v1562 = vsel %vm367, %v1537, 0
        %1564 = vmatprep.subr.bf16.mxu0 0
        %1565 = vmatpush1.bf16.msra.mxu0 0
        %1566 = vmatprep.subr.bf16.mxu0 0
        %1567 = vmatpush1.bf16.msra.mxu0 0
        %1568 = vmatprep.subr.bf16.mxu0 0
        %1569 = vmatpush1.bf16.msra.mxu0 0
        %1570 = vmatprep.subr.bf16.mxu0 0
        %1571 = vmatpush1.bf16.msra.mxu0 0
        %1572 = vmatprep.subr.bf16.mxu0 0
        %1573 = vmatpush1.bf16.msra.mxu0 0
        %1574 = vmatprep.subr.bf16.mxu0 0
        %1575 = vmatpush1.bf16.msra.mxu0 0
        %1576 = vmatprep.subr.bf16.mxu0 0
        %1577 = vmatpush1.bf16.msra.mxu0 %v1558
        %1578 = vmatprep.subr.bf16.mxu0 0
        %1579 = vmatpush1.bf16.msra.mxu0 %v1557
        %1580 = vmatprep.subr.bf16.mxu0 0
        %1581 = vmatpush2.bf16.msra.mxu0 0
        %1582 = vmatprep.subr.bf16.mxu0 0
        %1583 = vmatpush2.bf16.msra.mxu0 0
        %1584 = vmatprep.subr.bf16.mxu0 0
        %1585 = vmatpush2.bf16.msra.mxu0 0
        %1586 = vmatprep.subr.bf16.mxu0 0
        %1587 = vmatpush2.bf16.msra.mxu0 0
        %1588 = vmatprep.subr.bf16.mxu0 0
        %1589 = vmatpush2.bf16.msra.mxu0 0
        %1590 = vmatprep.subr.bf16.mxu0 0
        %1591 = vmatpush2.bf16.msra.mxu0 0
        %1592 = vmatprep.subr.bf16.mxu0 0
        %1593 = vmatpush2.bf16.msra.mxu0 0
        %1594 = vmatprep.subr.bf16.mxu0 0
        %1595 = vmatpush2.bf16.msra.mxu0 0
        %1596 = vmatprep.mubr.bf16.mxu0 0
        %1597 = vmatmul.mubr.bf16.gmra.mxu0 %v1562
        %v1598 = vpop.f32.mrf.mxu0
        %v1599 = vadd.f32 %v1547, %v1598
        %v1600 = vpop.f32.mrf.mxu0
        %v1601 = vpop.f32.mrf.mxu0
        %v1602 = vpop.f32.mrf.mxu0
        %1603 = vdwg.mxu0
        %v1604 = vsel %vm367, %v1599, 0.0
        %1605 = vadd.xlane.f32.xlu0 %v1604
        %v1606 = vpop.xlane.xlu0 %1605
        %v1607 = vrcp.pop 32.0
        %v1608 = vmul.f32 %v1606, %v1607
        %v1609 = vsub.f32 %v1599, %v1608
        %v1610 = vmul.f32 %v1609, %v1609
        %v1611 = vsel %vm367, %v1610, 0.0
        %1612 = vadd.xlane.f32.xlu0 %v1611
        %v1613 = vpop.xlane.xlu0 %1612
        %v1614 = vmul.f32 %v1613, %v1607
        %v1615 = vadd.f32 %v1614, 1e-05
        %v1616 = vrsqrt.pop %v1615
        %v1617 = vmul.f32 %v1609, %v1616
        %v1618 = vld [vmem:[%s5] sm:$0x1]
        %v1620 = vlaneseq
        %v1621 = vshrl.u32 %v1620, 7
        %v1622 = vsub.s32 0, %v1621
        %v1623 = vrot.slane %v1618, %v1622
        %v1625 = vmul.f32 %v1617, %v1623
        %v1626 = vld [vmem:[%s6] sm:$0x1]
        %v1628 = vlaneseq
        %v1629 = vshrl.u32 %v1628, 7
        %v1630 = vsub.s32 0, %v1629
        %v1631 = vrot.slane %v1626, %v1630
        %v1633 = vadd.f32 %v1625, %v1631
        %v1634 = vadd.f32 %v342, %v1633
        %1635 = vst.msk [vmem:[%s339] sm:$0xff] %vm367, %v1634
        %s1636 = sand.u32 %s201, 1
        %s1637 = scalar_lea.sflag [#allocation6], %s1636
        %s1638 = sand.u32 %s201, 1
        %s1639 = smul.addr %s1638, 8
        %s1640 = scalar_lea.vmem [#allocation10], %s1639
        // Predicated region
        $region68: #{tpu_custom_call.1} parent=47 // pred_check
          %p1641 = pneg %p211
        $region69: #{tpu_custom_call.1} parent=47 // pred_check_branch
          %1643 = sbr.rel (%p1641) target = $region71
        $region70: #{tpu_custom_call.1} parent=47 // pred_region
          %s1645 = ssub.s32 128, 128
          %1646 = vsyncadd %s1637, %s1645
          %s1647 = sadd.s32 %s30, %s29
          %s1648 = smul.addr %s1647, 128
          %s1649 = scalar_lea.hbm %s7, %s1648
          %s1651 = sshll.u32 %s1640, 4
          %s1652 = int_to_ptr.vmem [resolvable:$true] %s1651
          %1654 = dma.vmem_to_hbm [thread:$0]  %s1652, 128, %s1649, %s1637
        $region71: #{tpu_custom_call.1} parent=47 // pred_fallthru
          _
      $region48: #{tpu_custom_call.1} parent=5 // pred_fallthru
        _
      %p1655 = scmp.le.s32.totalorder 2, %s20
      // Predicated region
      $region72: #{tpu_custom_call.1} parent=5 // pred_check
        %p1656 = pneg %p1655
      $region73: #{tpu_custom_call.1} parent=5 // pred_check_branch
        %1658 = sbr.rel (%p1656) target = $region75
      $region74: #{tpu_custom_call.1} parent=5 // pred_region
        %s1659 = ssub.s32 %s20, 2
        // Predicated region
        $region76: #{tpu_custom_call.1} parent=74 // pred_check
          %p1660 = pneg %p217
        $region77: #{tpu_custom_call.1} parent=74 // pred_check_branch
          %1662 = sbr.rel (%p1660) target = $region79
        $region78: #{tpu_custom_call.1} parent=74 // pred_region
          %s1663 = sand.u32 %s202, 1
          %s1664 = scalar_lea.sflag [#allocation6], %s1663
          %s1665 = sand.u32 %s202, 1
          %s1666 = smul.addr %s1665, 8
          %s1667 = scalar_lea.vmem [#allocation10], %s1666
          %1668 = dma.done %s1664, 128
        $region79: #{tpu_custom_call.1} parent=74 // pred_fallthru
          _
      $region75: #{tpu_custom_call.1} parent=5 // pred_fallthru
        _
    $region6: #{tpu_custom_call.1} parent=1 // loop_footer
      %s24 = sadd.s32 1, %s20
    $region7: #{tpu_custom_call.1} parent=1 // loop_footer_branch
      %19 = sbr.rel target = $region3
    $region8: #{tpu_custom_call.1} parent=1 // loop_exit
      _
    %1669 = vsyncpa [#allocation5], 1
    %s1670 = scalar_lea.sflag [#allocation5], 1
    %1671 = vsyncpa %s1670, 1
    %1672 = vsyncpa [#allocation8], 1
    %1673 = vsyncpa [#allocation6], 1
    %s1674 = scalar_lea.sflag [#allocation6], 1
    %1675 = vsyncpa %s1674, 1

</llo_original>
